<compile_context>
chip_gen: v5e
topology: v5e:2x2
jax: 0.10.0
libtpu: 0.0.40
codegen_flags: <defaults>
</compile_context>

<pallas_src>
import functools

import jax
import jax.numpy as jnp
from jax import lax
from jax.experimental import pallas as pl
from jax.experimental.pallas import tpu as pltpu


def _round_up(n, m):
    return ((n + m - 1) // m) * m


def _masked_layernorm(v, g, b, mask, d_real, eps=1e-5):
    """LayerNorm over the last dim where only the first d_real lanes are real.

    Assumes padded lanes of `v` are zero (true at both call sites), so the
    plain lane-sum divided by d_real is the exact mean over real lanes.
    """
    inv_d = 1.0 / float(d_real)
    mean = jnp.sum(v, axis=-1, keepdims=True) * inv_d
    centered = (v - mean) * mask                       # zero out padded lanes
    var = jnp.sum(centered * centered, axis=-1, keepdims=True) * inv_d
    return centered * lax.rsqrt(var + eps) * g + b     # g/b zero-padded


def attention_stream_kernel(mu_ref, dec_b_ref,              # SMEM scalars
                            x_ref, xprev_ref,                # [S, Bt, Dp]
                            dec_w_ref,                       # [1, Dp]
                            ln1_g_ref, ln1_b_ref,            # [1, Dp]
                            wrv_w_ref, wrv_b_ref,            # [Dp,2Dp]/[1,2Dp]
                            ln2_g_ref, ln2_b_ref,            # [1, Dp]
                            out_ref,                         # [S, Bt, Dp]
                            *, d_real):
    mu = mu_ref[0]
    dec_b = dec_b_ref[0]
    S, Bt, Dp = x_ref.shape

    x = x_ref[...]                                 # [S, Bt, Dp]  time-major
    x_prev = xprev_ref[...]

    # Lane mask selecting the real (unpadded) feature dims.
    lane = lax.broadcasted_iota(jnp.int32, (1, Dp), 1)
    mask = (lane < d_real).astype(jnp.float32)     # [1, Dp]

    # ---- Shift: shifted = mu*x + (1-mu)*x_prev (padded lanes stay 0) -------
    shifted = mu * x + (1.0 - mu) * x_prev         # [S, Bt, Dp]

    # ---- Hoisted transcendentals / reductions (full-tile, vectorized) ------
    dec_w = dec_w_ref[...]                         # [1, Dp] (zero-padded)
    decay = jax.nn.sigmoid(
        jnp.sum(shifted * dec_w, axis=-1, keepdims=True) + dec_b)  # [S,Bt,1]
    # NOTE: exp(shifted) is unstabilized, matching the PyTorch reference.
    e = jnp.exp(shifted) * mask                    # [S, Bt, Dp]
    se = jnp.sum(e, axis=-1, keepdims=True)        # [S, Bt, 1]
    u = e * shifted                                # [S, Bt, Dp]

    # ---- SequenceMergingSeq: log-depth (Hillis-Steele) associative scan ----
    # Linear recurrence a_t = d_t*a_{t-1} + se_t ; b_t = d_t*b_{t-1} + u_t
    # combine((d1,v1),(d2,v2)) = (d1*d2, d2*v1 + v2); initial state is 0, so
    # the inclusive-prefix v IS the state.  Shifts along time are major-dim
    # slices (no sublane/lane movement).
    def shift_fill(v, k, fill):
        head = jnp.full((k,) + v.shape[1:], fill, v.dtype)
        return jnp.concatenate([head, v[:S - k]], axis=0)

    d, va, vb = decay, se, u
    k = 1
    while k < S:                                   # S static -> log2(S) rounds
        d_prev = shift_fill(d, k, 1.0)
        va_prev = shift_fill(va, k, 0.0)
        vb_prev = shift_fill(vb, k, 0.0)
        va = d * va_prev + va                      # [S, Bt, 1]
        vb = d * vb_prev + vb                      # [S, Bt, Dp]
        d = d * d_prev
        k *= 2
    # TODO(synk): for very long production S, chunk the scan over S-tiles and
    # carry the (d, a, b) state across an "arbitrary" grid axis.

    # Deferred divide: one vectorized reciprocal (+1 Newton step for f32 acc).
    den = va + 1e-8
    inv = pl.reciprocal(den, approx=True)
    inv = inv * (2.0 - den * inv)
    merged = vb * inv                              # [S, Bt, Dp]

    # ---- StateCoupling: fused Wr|Wv bf16 matmul on the MXU, M = S*Bt -------
    m2 = _masked_layernorm(merged.reshape(S * Bt, Dp),
                           ln1_g_ref[...], ln1_b_ref[...], mask, d_real)
    rv = jnp.dot(m2.astype(wrv_w_ref.dtype), wrv_w_ref[...],
                 preferred_element_type=jnp.float32) + wrv_b_ref[...]
    gate = jax.nn.sigmoid(rv[:, :Dp])              # gate cols [0:Dp]
    value = rv[:, Dp:]                             # value cols [Dp:2Dp]
    coupled = _masked_layernorm(gate * value, ln2_g_ref[...], ln2_b_ref[...],
                                mask, d_real)

    # ---- Residual: single dense store of the full block --------------------
    out_ref[...] = shifted + coupled.reshape(S, Bt, Dp)


def prepare_params(params, d_model, mxu_dtype=jnp.bfloat16):
    """Pad / fuse the weights ONCE (not per forward call)."""
    D = d_model
    Dp = _round_up(D, 128)

    def pad_last(a):
        a = jnp.asarray(a, jnp.float32)
        extra = Dp - a.shape[-1]
        if extra == 0:
            return a
        widths = [(0, 0)] * (a.ndim - 1) + [(0, extra)]
        return jnp.pad(a, widths)

    # Fused StateCoupling weights: gate block in cols [0:D], value block in
    # cols [Dp:Dp+D]; padded rows/cols are zero.
    wrv_w = jnp.zeros((Dp, 2 * Dp), jnp.float32)
    wrv_w = wrv_w.at[:D, :D].set(params["wr_w"])
    wrv_w = wrv_w.at[:D, Dp:Dp + D].set(params["wv_w"])
    wrv_b = jnp.zeros((1, 2 * Dp), jnp.float32)
    wrv_b = wrv_b.at[:, :D].set(params["wr_b"])
    wrv_b = wrv_b.at[:, Dp:Dp + D].set(params["wv_b"])

    return {
        "d_model": D,
        "d_pad": Dp,
        "mu": jnp.asarray(params["mu"], jnp.float32).reshape(1),
        "dec_b": jnp.asarray(params["dec_b"], jnp.float32).reshape(1),
        "dec_w": pad_last(params["dec_w"]).reshape(1, Dp),
        "ln1_g": pad_last(params["ln1_g"]).reshape(1, Dp),
        "ln1_b": pad_last(params["ln1_b"]).reshape(1, Dp),
        "ln2_g": pad_last(params["ln2_g"]).reshape(1, Dp),
        "ln2_b": pad_last(params["ln2_b"]).reshape(1, Dp),
        "wrv_w": wrv_w.astype(mxu_dtype),   # bf16 MXU operand by default
        "wrv_b": wrv_b,                     # bias add stays f32
    }


def attention_stream_block(x, x_prev, prep, *, block_b=8, return_padded=False):
    if x_prev is None:                 # Shift returns x when x_prev is None
        x_prev = x
    D, Dp = prep["d_model"], prep["d_pad"]
    B, S, Dx = x.shape
    assert Dx == D

    Sp = _round_up(max(S, 8), 8)       # sublane-aligned time extent
    Bt = block_b                       # batch rows per block (f32 sublanes)
    nb = pl.cdiv(B, Bt)
    if nb % 2:                         # even grid: both v7x TensorCores busy
        nb += 1
    Bp = nb * Bt

    # Time-major padded layout [Sp, Bp, Dp]: batch sits on the sublane axis so
    # the recurrence works on full (8,128) vregs and time indexing is a cheap
    # major-dim slice.  Padded rows/lanes are zero (kept zero by the kernel).
    # TODO(synk): in a multi-layer model keep this padded time-major layout
    # end-to-end between blocks (return_padded=True) to avoid the
    # pad/transpose/slice HBM round trips on every call.
    def prep_act(a):
        a = jnp.transpose(jnp.asarray(a, jnp.float32), (1, 0, 2))   # [S,B,D]
        return jnp.pad(a, ((0, Sp - S), (0, Bp - B), (0, Dp - D)))

    xp, xpp = prep_act(x), prep_act(x_prev)

    act_spec = pl.BlockSpec((Sp, Bt, Dp), lambda b: (0, b, 0))
    smem_spec = pl.BlockSpec(memory_space=pltpu.MemorySpace.SMEM)

    def wspec(shape):
        return pl.BlockSpec(shape, lambda b: (0, 0))

    # Explicit VMEM budget (double-buffered activations + weights + slack);
    # v7x has only 64 MiB physical VMEM, so don't rely on defaults.
    act_bytes = Sp * Bt * Dp * 4
    w_bytes = (prep["wrv_w"].size * prep["wrv_w"].dtype.itemsize
               + prep["wrv_b"].size * 4 + 5 * Dp * 4)
    vmem_limit = int(min(max(2 * 3 * act_bytes + 2 * w_bytes + (2 << 20),
                             8 << 20), 100 << 20))
    # TODO(synk): for production Dp (>=1024) additionally set
    # pipeline_mode=pl.Buffered(1) on the constant-index weight BlockSpecs to
    # drop their second VMEM buffer on v7x.

    kernel = functools.partial(attention_stream_kernel, d_real=D)

    out = pl.pallas_call(
        kernel,
        out_shape=jax.ShapeDtypeStruct((Sp, Bp, Dp), jnp.float32),
        grid=(nb,),
        in_specs=[smem_spec, smem_spec,                      # mu, dec_b
                  act_spec, act_spec,                        # x, x_prev
                  wspec((1, Dp)),                            # dec_w
                  wspec((1, Dp)), wspec((1, Dp)),            # ln1 g/b
                  wspec((Dp, 2 * Dp)), wspec((1, 2 * Dp)),   # fused Wr|Wv
                  wspec((1, Dp)), wspec((1, Dp))],           # ln2 g/b
        out_specs=act_spec,
        compiler_params=pltpu.CompilerParams(
            dimension_semantics=("parallel",),
            vmem_limit_bytes=vmem_limit),
    )(prep["mu"], prep["dec_b"], xp, xpp, prep["dec_w"],
      prep["ln1_g"], prep["ln1_b"], prep["wrv_w"], prep["wrv_b"],
      prep["ln2_g"], prep["ln2_b"])

    if return_padded:
        return out                                # [Sp, Bp, Dp] time-major
    return jnp.transpose(out[:S, :B, :D], (1, 0, 2))


def reference(x, x_prev, p):
    """Pure-JAX reproduction of the PyTorch forward (accurate f32 matmuls)."""
    hp = jax.lax.Precision.HIGHEST
    mu = p["mu"][0]
    shifted = x if x_prev is None else mu * x + (1.0 - mu) * x_prev
    B, S, D = x.shape
    a = jnp.zeros((B, 1), jnp.float32)
    b = jnp.zeros((B, D), jnp.float32)
    outs = []
    for t in range(S):
        c = shifted[:, t, :]
        decay = jax.nn.sigmoid(jnp.dot(c, p["dec_w"].T, precision=hp)
                               + p["dec_b"])
        e = jnp.exp(c)
        a = decay * a + e.sum(axis=1, keepdims=True)
        b = decay * b + e * c
        outs.append(b / (a + 1e-8))
    merged = jnp.stack(outs, axis=1)

    def ln(v, g, bb):
        m = v.mean(-1, keepdims=True)
        var = ((v - m) ** 2).mean(-1, keepdims=True)
        return (v - m) / jnp.sqrt(var + 1e-5) * g + bb

    merged = ln(merged, p["ln1_g"], p["ln1_b"])
    gate = jax.nn.sigmoid(jnp.dot(merged, p["wr_w"], precision=hp) + p["wr_b"])
    value = jnp.dot(merged, p["wv_w"], precision=hp) + p["wv_b"]
    coupled = ln(gate * value, p["ln2_g"], p["ln2_b"])
    return shifted + coupled


if __name__ == "__main__":
    D = 50                            # embedding_dim from the PyTorch module
    key = jax.random.PRNGKey(0)
    ks = jax.random.split(key, 9)

    params = {
        "mu": jnp.array([0.5], jnp.float32),                           # Shift
        "dec_w": jax.random.normal(ks[0], (1, D), jnp.float32) * 0.1,
        "dec_b": jax.random.normal(ks[1], (1,), jnp.float32) * 0.1,
        "ln1_g": jnp.ones((1, D), jnp.float32),
        "ln1_b": jnp.zeros((1, D), jnp.float32),
        "wr_w": jax.random.normal(ks[2], (D, D), jnp.float32) * 0.1,  # Wr.weight.T
        "wr_b": jax.random.normal(ks[3], (1, D), jnp.float32) * 0.1,
        "wv_w": jax.random.normal(ks[4], (D, D), jnp.float32) * 0.1,  # Wv.weight.T
        "wv_b": jax.random.normal(ks[5], (1, D), jnp.float32) * 0.1,
        "ln2_g": jnp.ones((1, D), jnp.float32),
        "ln2_b": jnp.zeros((1, D), jnp.float32),
    }
    prep = prepare_params(params, D)          # fused/padded weights, bf16 MXU

    # Case 1: B=2, S=8 (batch padded 2->16, feature 50->128).
    B, S = 2, 8
    x = jax.random.normal(ks[6], (B, S, D), jnp.float32)
    x_prev = jax.random.normal(ks[7], (B, S, D), jnp.float32)
    out = jax.block_until_ready(attention_stream_block(x, x_prev, prep))
    ref = reference(x, x_prev, params)
    assert out.shape == (B, S, D)
    # Tolerance reflects bf16 MXU operands for the StateCoupling matmul; all
    # other math (scan, LayerNorm, exp/sigmoid, divide) is f32.
    assert jnp.allclose(out, ref, atol=4e-2, rtol=2e-2), (
        f"case1 max abs err {jnp.max(jnp.abs(out - ref))}")

    # Case 2: ragged shapes (B=5, S=6) + the x_prev=None path of Shift.
    B2, S2 = 5, 6
    x2 = jax.random.normal(ks[8], (B2, S2, D), jnp.float32)
    out2 = jax.block_until_ready(attention_stream_block(x2, None, prep))
    ref2 = reference(x2, None, params)
    assert out2.shape == (B2, S2, D)
    assert jnp.allclose(out2, ref2, atol=4e-2, rtol=2e-2), (
        f"case2 max abs err {jnp.max(jnp.abs(out2 - ref2))}")

    print("KERNEL_OK")
</pallas_src>

<mosaic_0001>
module attributes {stable_mosaic.version = 11 : i64} {
  func.func @attention_stream_kernel(%arg0: i32, %arg1: memref<1xf32, #tpu.memory_space<smem>>, %arg2: memref<1xf32, #tpu.memory_space<smem>>, %arg3: memref<8x8x128xf32, #tpu.memory_space<vmem>>, %arg4: memref<8x8x128xf32, #tpu.memory_space<vmem>>, %arg5: memref<1x128xf32, #tpu.memory_space<vmem>>, %arg6: memref<1x128xf32, #tpu.memory_space<vmem>>, %arg7: memref<1x128xf32, #tpu.memory_space<vmem>>, %arg8: memref<128x256xbf16, #tpu.memory_space<vmem>>, %arg9: memref<1x256xf32, #tpu.memory_space<vmem>>, %arg10: memref<1x128xf32, #tpu.memory_space<vmem>>, %arg11: memref<1x128xf32, #tpu.memory_space<vmem>>, %arg12: memref<8x8x128xf32, #tpu.memory_space<vmem>>) attributes {dimension_semantics = [#tpu.dimension_semantics<parallel>], iteration_bounds = array<i64: 2>, scalar_prefetch = 0 : i64, scratch_operands = 0 : i64, tpu.core_type = #tpu.core_type<tc>, window_params = [{transform_indices = @transform_0, window_bounds = array<i64: 1>}, {transform_indices = @transform_1, window_bounds = array<i64: 1>}, {transform_indices = @transform_2, window_bounds = array<i64: 8, 8, 128>}, {transform_indices = @transform_3, window_bounds = array<i64: 8, 8, 128>}, {pipeline_mode = #tpu.pipeline_mode<synchronous>, transform_indices = @transform_4, window_bounds = array<i64: 1, 128>}, {pipeline_mode = #tpu.pipeline_mode<synchronous>, transform_indices = @transform_5, window_bounds = array<i64: 1, 128>}, {pipeline_mode = #tpu.pipeline_mode<synchronous>, transform_indices = @transform_6, window_bounds = array<i64: 1, 128>}, {pipeline_mode = #tpu.pipeline_mode<synchronous>, transform_indices = @transform_7, window_bounds = array<i64: 128, 256>}, {pipeline_mode = #tpu.pipeline_mode<synchronous>, transform_indices = @transform_8, window_bounds = array<i64: 1, 256>}, {pipeline_mode = #tpu.pipeline_mode<synchronous>, transform_indices = @transform_9, window_bounds = array<i64: 1, 128>}, {pipeline_mode = #tpu.pipeline_mode<synchronous>, transform_indices = @transform_10, window_bounds = array<i64: 1, 128>}, {transform_indices = @transform_11, window_bounds = array<i64: 8, 8, 128>}]} {
    %c0 = arith.constant 0 : index
    %0 = memref.load %arg1[%c0] : memref<1xf32, #tpu.memory_space<smem>>
    %c0_0 = arith.constant 0 : index
    %1 = memref.load %arg2[%c0_0] : memref<1xf32, #tpu.memory_space<smem>>
    %c0_1 = arith.constant 0 : index
    %c0_2 = arith.constant 0 : index
    %c0_3 = arith.constant 0 : index
    %2 = vector.load %arg3[%c0_1, %c0_2, %c0_3] : memref<8x8x128xf32, #tpu.memory_space<vmem>>, vector<8x8x128xf32>
    %c0_4 = arith.constant 0 : index
    %c0_5 = arith.constant 0 : index
    %c0_6 = arith.constant 0 : index
    %3 = vector.load %arg4[%c0_4, %c0_5, %c0_6] : memref<8x8x128xf32, #tpu.memory_space<vmem>>, vector<8x8x128xf32>
    %4 = tpu.iota {dimensions = array<i32: 1>} : vector<1x128xi32>
    %c50_i32 = arith.constant 50 : i32
    %5 = vector.broadcast %c50_i32 : i32 to vector<1x128xi32>
    %6 = arith.cmpi slt, %4, %5 : vector<1x128xi32>
    %7 = arith.extui %6 : vector<1x128xi1> to vector<1x128xi32>
    %8 = arith.sitofp %7 : vector<1x128xi32> to vector<1x128xf32>
    %9 = vector.broadcast %0 : f32 to vector<8x8x128xf32>
    %10 = arith.mulf %9, %2 : vector<8x8x128xf32>
    %cst = arith.constant 1.000000e+00 : f32
    %11 = arith.subf %cst, %0 : f32
    %12 = vector.broadcast %11 : f32 to vector<8x8x128xf32>
    %13 = arith.mulf %12, %3 : vector<8x8x128xf32>
    %14 = arith.addf %10, %13 : vector<8x8x128xf32>
    %c0_7 = arith.constant 0 : index
    %c0_8 = arith.constant 0 : index
    %15 = vector.load %arg5[%c0_7, %c0_8] : memref<1x128xf32, #tpu.memory_space<vmem>>, vector<1x128xf32>
    %16 = vector.shape_cast %15 : vector<1x128xf32> to vector<1x1x128xf32>
    %17 = vector.broadcast %16 : vector<1x1x128xf32> to vector<8x8x128xf32>
    %18 = arith.mulf %14, %17 : vector<8x8x128xf32>
    %cst_9 = arith.constant dense<0.000000e+00> : vector<8x8xf32>
    %19 = vector.multi_reduction <add>, %18, %cst_9 [2] : vector<8x8x128xf32> to vector<8x8xf32>
    %20 = vector.shape_cast %19 : vector<8x8xf32> to vector<8x8x1xf32>
    %21 = vector.broadcast %1 : f32 to vector<8x8x1xf32>
    %22 = arith.addf %20, %21 : vector<8x8x1xf32>
    %23 = arith.negf %22 : vector<8x8x1xf32>
    %24 = math.exp %23 : vector<8x8x1xf32>
    %cst_10 = arith.constant 1.000000e+00 : f32
    %25 = vector.broadcast %cst_10 : f32 to vector<8x8x1xf32>
    %26 = arith.addf %25, %24 : vector<8x8x1xf32>
    %27 = arith.divf %25, %26 : vector<8x8x1xf32>
    %28 = math.exp %14 : vector<8x8x128xf32>
    %29 = vector.shape_cast %8 : vector<1x128xf32> to vector<1x1x128xf32>
    %30 = vector.broadcast %29 : vector<1x1x128xf32> to vector<8x8x128xf32>
    %31 = arith.mulf %28, %30 : vector<8x8x128xf32>
    %cst_11 = arith.constant dense<0.000000e+00> : vector<8x8xf32>
    %32 = vector.multi_reduction <add>, %31, %cst_11 [2] : vector<8x8x128xf32> to vector<8x8xf32>
    %33 = vector.shape_cast %32 : vector<8x8xf32> to vector<8x8x1xf32>
    %34 = arith.mulf %31, %14 : vector<8x8x128xf32>
    %cst_12 = arith.constant 1.000000e+00 : f32
    %35 = vector.broadcast %cst_12 : f32 to vector<1x8x1xf32>
    %36 = vector.extract_strided_slice %27 {offsets = [0, 0, 0], sizes = [7, 8, 1], strides = [1, 1, 1]} : vector<8x8x1xf32> to vector<7x8x1xf32>
    %37 = tpu.concatenate %35, %36 in 0 : vector<1x8x1xf32>, vector<7x8x1xf32> -> vector<8x8x1xf32>
    %cst_13 = arith.constant 0.000000e+00 : f32
    %38 = vector.broadcast %cst_13 : f32 to vector<1x8x1xf32>
    %39 = vector.extract_strided_slice %33 {offsets = [0, 0, 0], sizes = [7, 8, 1], strides = [1, 1, 1]} : vector<8x8x1xf32> to vector<7x8x1xf32>
    %40 = tpu.concatenate %38, %39 in 0 : vector<1x8x1xf32>, vector<7x8x1xf32> -> vector<8x8x1xf32>
    %cst_14 = arith.constant 0.000000e+00 : f32
    %41 = vector.broadcast %cst_14 : f32 to vector<1x8x128xf32>
    %42 = vector.extract_strided_slice %34 {offsets = [0, 0, 0], sizes = [7, 8, 128], strides = [1, 1, 1]} : vector<8x8x128xf32> to vector<7x8x128xf32>
    %43 = tpu.concatenate %41, %42 in 0 : vector<1x8x128xf32>, vector<7x8x128xf32> -> vector<8x8x128xf32>
    %44 = arith.mulf %27, %40 : vector<8x8x1xf32>
    %45 = arith.addf %44, %33 : vector<8x8x1xf32>
    %46 = vector.broadcast %27 : vector<8x8x1xf32> to vector<8x8x128xf32>
    %47 = arith.mulf %46, %43 : vector<8x8x128xf32>
    %48 = arith.addf %47, %34 : vector<8x8x128xf32>
    %49 = arith.mulf %27, %37 : vector<8x8x1xf32>
    %cst_15 = arith.constant 1.000000e+00 : f32
    %50 = vector.broadcast %cst_15 : f32 to vector<2x8x1xf32>
    %51 = vector.extract_strided_slice %49 {offsets = [0, 0, 0], sizes = [6, 8, 1], strides = [1, 1, 1]} : vector<8x8x1xf32> to vector<6x8x1xf32>
    %52 = tpu.concatenate %50, %51 in 0 : vector<2x8x1xf32>, vector<6x8x1xf32> -> vector<8x8x1xf32>
    %cst_16 = arith.constant 0.000000e+00 : f32
    %53 = vector.broadcast %cst_16 : f32 to vector<2x8x1xf32>
    %54 = vector.extract_strided_slice %45 {offsets = [0, 0, 0], sizes = [6, 8, 1], strides = [1, 1, 1]} : vector<8x8x1xf32> to vector<6x8x1xf32>
    %55 = tpu.concatenate %53, %54 in 0 : vector<2x8x1xf32>, vector<6x8x1xf32> -> vector<8x8x1xf32>
    %cst_17 = arith.constant 0.000000e+00 : f32
    %56 = vector.broadcast %cst_17 : f32 to vector<2x8x128xf32>
    %57 = vector.extract_strided_slice %48 {offsets = [0, 0, 0], sizes = [6, 8, 128], strides = [1, 1, 1]} : vector<8x8x128xf32> to vector<6x8x128xf32>
    %58 = tpu.concatenate %56, %57 in 0 : vector<2x8x128xf32>, vector<6x8x128xf32> -> vector<8x8x128xf32>
    %59 = arith.mulf %49, %55 : vector<8x8x1xf32>
    %60 = arith.addf %59, %45 : vector<8x8x1xf32>
    %61 = vector.broadcast %49 : vector<8x8x1xf32> to vector<8x8x128xf32>
    %62 = arith.mulf %61, %58 : vector<8x8x128xf32>
    %63 = arith.addf %62, %48 : vector<8x8x128xf32>
    %64 = arith.mulf %49, %52 : vector<8x8x1xf32>
    %cst_18 = arith.constant 0.000000e+00 : f32
    %65 = vector.broadcast %cst_18 : f32 to vector<4x8x1xf32>
    %66 = vector.extract_strided_slice %60 {offsets = [0, 0, 0], sizes = [4, 8, 1], strides = [1, 1, 1]} : vector<8x8x1xf32> to vector<4x8x1xf32>
    %67 = tpu.concatenate %65, %66 in 0 : vector<4x8x1xf32>, vector<4x8x1xf32> -> vector<8x8x1xf32>
    %cst_19 = arith.constant 0.000000e+00 : f32
    %68 = vector.broadcast %cst_19 : f32 to vector<4x8x128xf32>
    %69 = vector.extract_strided_slice %63 {offsets = [0, 0, 0], sizes = [4, 8, 128], strides = [1, 1, 1]} : vector<8x8x128xf32> to vector<4x8x128xf32>
    %70 = tpu.concatenate %68, %69 in 0 : vector<4x8x128xf32>, vector<4x8x128xf32> -> vector<8x8x128xf32>
    %71 = arith.mulf %64, %67 : vector<8x8x1xf32>
    %72 = arith.addf %71, %60 : vector<8x8x1xf32>
    %73 = vector.broadcast %64 : vector<8x8x1xf32> to vector<8x8x128xf32>
    %74 = arith.mulf %73, %70 : vector<8x8x128xf32>
    %75 = arith.addf %74, %63 : vector<8x8x128xf32>
    %cst_20 = arith.constant 9.99999993E-9 : f32
    %76 = vector.broadcast %cst_20 : f32 to vector<8x8x1xf32>
    %77 = arith.addf %72, %76 : vector<8x8x1xf32>
    %78 = tpu.reciprocal %77 {approx = true} : vector<8x8x1xf32> -> vector<8x8x1xf32>
    %79 = arith.mulf %77, %78 : vector<8x8x1xf32>
    %cst_21 = arith.constant 2.000000e+00 : f32
    %80 = vector.broadcast %cst_21 : f32 to vector<8x8x1xf32>
    %81 = arith.subf %80, %79 : vector<8x8x1xf32>
    %82 = arith.mulf %78, %81 : vector<8x8x1xf32>
    %83 = vector.broadcast %82 : vector<8x8x1xf32> to vector<8x8x128xf32>
    %84 = arith.mulf %75, %83 : vector<8x8x128xf32>
    %85 = vector.shape_cast %84 : vector<8x8x128xf32> to vector<64x128xf32>
    %c0_22 = arith.constant 0 : index
    %c0_23 = arith.constant 0 : index
    %86 = vector.load %arg6[%c0_22, %c0_23] : memref<1x128xf32, #tpu.memory_space<vmem>>, vector<1x128xf32>
    %c0_24 = arith.constant 0 : index
    %c0_25 = arith.constant 0 : index
    %87 = vector.load %arg7[%c0_24, %c0_25] : memref<1x128xf32, #tpu.memory_space<vmem>>, vector<1x128xf32>
    %cst_26 = arith.constant dense<0.000000e+00> : vector<64xf32>
    %88 = vector.multi_reduction <add>, %85, %cst_26 [1] : vector<64x128xf32> to vector<64xf32>
    %89 = vector.shape_cast %88 : vector<64xf32> to vector<64x1xf32>
    %cst_27 = arith.constant 2.000000e-02 : f32
    %90 = vector.broadcast %cst_27 : f32 to vector<64x1xf32>
    %91 = arith.mulf %89, %90 : vector<64x1xf32>
    %92 = vector.broadcast %91 : vector<64x1xf32> to vector<64x128xf32>
    %93 = arith.subf %85, %92 : vector<64x128xf32>
    %94 = vector.broadcast %8 : vector<1x128xf32> to vector<64x128xf32>
    %95 = arith.mulf %93, %94 : vector<64x128xf32>
    %96 = arith.mulf %95, %95 : vector<64x128xf32>
    %cst_28 = arith.constant dense<0.000000e+00> : vector<64xf32>
    %97 = vector.multi_reduction <add>, %96, %cst_28 [1] : vector<64x128xf32> to vector<64xf32>
    %98 = vector.shape_cast %97 : vector<64xf32> to vector<64x1xf32>
    %cst_29 = arith.constant 2.000000e-02 : f32
    %99 = vector.broadcast %cst_29 : f32 to vector<64x1xf32>
    %100 = arith.mulf %98, %99 : vector<64x1xf32>
    %cst_30 = arith.constant 9.99999974E-6 : f32
    %101 = vector.broadcast %cst_30 : f32 to vector<64x1xf32>
    %102 = arith.addf %100, %101 : vector<64x1xf32>
    %103 = math.rsqrt %102 : vector<64x1xf32>
    %104 = vector.broadcast %103 : vector<64x1xf32> to vector<64x128xf32>
    %105 = arith.mulf %95, %104 : vector<64x128xf32>
    %106 = vector.broadcast %86 : vector<1x128xf32> to vector<64x128xf32>
    %107 = arith.mulf %105, %106 : vector<64x128xf32>
    %108 = vector.broadcast %87 : vector<1x128xf32> to vector<64x128xf32>
    %109 = arith.addf %107, %108 : vector<64x128xf32>
    %110 = arith.truncf %109 : vector<64x128xf32> to vector<64x128xbf16>
    %c0_31 = arith.constant 0 : index
    %c0_32 = arith.constant 0 : index
    %111 = vector.load %arg8[%c0_31, %c0_32] : memref<128x256xbf16, #tpu.memory_space<vmem>>, vector<128x256xbf16>
    %cst_33 = arith.constant dense<0.000000e+00> : vector<64x256xf32>
    %112 = tpu.matmul %110, %111, %cst_33 {dimension_numbers = #tpu.dot_dimension_numbers<[1], [0], [0], [1], [0, 0, 1, 1], [], []>} : vector<64x128xbf16>, vector<128x256xbf16>, vector<64x256xf32> -> vector<64x256xf32>
    %c0_34 = arith.constant 0 : index
    %c0_35 = arith.constant 0 : index
    %113 = vector.load %arg9[%c0_34, %c0_35] : memref<1x256xf32, #tpu.memory_space<vmem>>, vector<1x256xf32>
    %114 = vector.broadcast %113 : vector<1x256xf32> to vector<64x256xf32>
    %115 = arith.addf %112, %114 : vector<64x256xf32>
    %116 = vector.extract_strided_slice %115 {offsets = [0, 0], sizes = [64, 128], strides = [1, 1]} : vector<64x256xf32> to vector<64x128xf32>
    %117 = arith.negf %116 : vector<64x128xf32>
    %118 = math.exp %117 : vector<64x128xf32>
    %cst_36 = arith.constant 1.000000e+00 : f32
    %119 = vector.broadcast %cst_36 : f32 to vector<64x128xf32>
    %120 = arith.addf %119, %118 : vector<64x128xf32>
    %121 = arith.divf %119, %120 : vector<64x128xf32>
    %122 = vector.extract_strided_slice %115 {offsets = [0, 128], sizes = [64, 128], strides = [1, 1]} : vector<64x256xf32> to vector<64x128xf32>
    %123 = arith.mulf %121, %122 : vector<64x128xf32>
    %c0_37 = arith.constant 0 : index
    %c0_38 = arith.constant 0 : index
    %124 = vector.load %arg10[%c0_37, %c0_38] : memref<1x128xf32, #tpu.memory_space<vmem>>, vector<1x128xf32>
    %c0_39 = arith.constant 0 : index
    %c0_40 = arith.constant 0 : index
    %125 = vector.load %arg11[%c0_39, %c0_40] : memref<1x128xf32, #tpu.memory_space<vmem>>, vector<1x128xf32>
    %cst_41 = arith.constant dense<0.000000e+00> : vector<64xf32>
    %126 = vector.multi_reduction <add>, %123, %cst_41 [1] : vector<64x128xf32> to vector<64xf32>
    %127 = vector.shape_cast %126 : vector<64xf32> to vector<64x1xf32>
    %cst_42 = arith.constant 2.000000e-02 : f32
    %128 = vector.broadcast %cst_42 : f32 to vector<64x1xf32>
    %129 = arith.mulf %127, %128 : vector<64x1xf32>
    %130 = vector.broadcast %129 : vector<64x1xf32> to vector<64x128xf32>
    %131 = arith.subf %123, %130 : vector<64x128xf32>
    %132 = vector.broadcast %8 : vector<1x128xf32> to vector<64x128xf32>
    %133 = arith.mulf %131, %132 : vector<64x128xf32>
    %134 = arith.mulf %133, %133 : vector<64x128xf32>
    %cst_43 = arith.constant dense<0.000000e+00> : vector<64xf32>
    %135 = vector.multi_reduction <add>, %134, %cst_43 [1] : vector<64x128xf32> to vector<64xf32>
    %136 = vector.shape_cast %135 : vector<64xf32> to vector<64x1xf32>
    %cst_44 = arith.constant 2.000000e-02 : f32
    %137 = vector.broadcast %cst_44 : f32 to vector<64x1xf32>
    %138 = arith.mulf %136, %137 : vector<64x1xf32>
    %cst_45 = arith.constant 9.99999974E-6 : f32
    %139 = vector.broadcast %cst_45 : f32 to vector<64x1xf32>
    %140 = arith.addf %138, %139 : vector<64x1xf32>
    %141 = math.rsqrt %140 : vector<64x1xf32>
    %142 = vector.broadcast %141 : vector<64x1xf32> to vector<64x128xf32>
    %143 = arith.mulf %133, %142 : vector<64x128xf32>
    %144 = vector.broadcast %124 : vector<1x128xf32> to vector<64x128xf32>
    %145 = arith.mulf %143, %144 : vector<64x128xf32>
    %146 = vector.broadcast %125 : vector<1x128xf32> to vector<64x128xf32>
    %147 = arith.addf %145, %146 : vector<64x128xf32>
    %148 = vector.shape_cast %147 : vector<64x128xf32> to vector<8x8x128xf32>
    %149 = arith.addf %14, %148 : vector<8x8x128xf32>
    %c0_46 = arith.constant 0 : index
    %c0_47 = arith.constant 0 : index
    %c0_48 = arith.constant 0 : index
    %150 = vector.load %arg12[%c0_46, %c0_47, %c0_48] : memref<8x8x128xf32, #tpu.memory_space<vmem>>, vector<8x8x128xf32>
    tpu.vector_store %arg12[%c0_46, %c0_47, %c0_48], %149 {strides = array<i32>} : memref<8x8x128xf32, #tpu.memory_space<vmem>>, vector<8x8x128xf32>,
    return
  }
  func.func @transform_0(%arg0: i32) -> i32 {
    %c0_i32 = arith.constant 0 : i32
    %c0_i32_0 = arith.constant 0 : i32
    return %c0_i32 : i32
  }
  func.func @transform_1(%arg0: i32) -> i32 {
    %c0_i32 = arith.constant 0 : i32
    %c0_i32_0 = arith.constant 0 : i32
    return %c0_i32 : i32
  }
  func.func @transform_2(%arg0: i32) -> (i32, i32, i32) {
    %c0_i32 = arith.constant 0 : i32
    %c0_i32_0 = arith.constant 0 : i32
    %c0_i32_1 = arith.constant 0 : i32
    return %c0_i32, %arg0, %c0_i32_0 : i32, i32, i32
  }
  func.func @transform_3(%arg0: i32) -> (i32, i32, i32) {
    %c0_i32 = arith.constant 0 : i32
    %c0_i32_0 = arith.constant 0 : i32
    %c0_i32_1 = arith.constant 0 : i32
    return %c0_i32, %arg0, %c0_i32_0 : i32, i32, i32
  }
  func.func @transform_4(%arg0: i32) -> (i32, i32) {
    %c0_i32 = arith.constant 0 : i32
    %c0_i32_0 = arith.constant 0 : i32
    %c0_i32_1 = arith.constant 0 : i32
    return %c0_i32, %c0_i32_0 : i32, i32
  }
  func.func @transform_5(%arg0: i32) -> (i32, i32) {
    %c0_i32 = arith.constant 0 : i32
    %c0_i32_0 = arith.constant 0 : i32
    %c0_i32_1 = arith.constant 0 : i32
    return %c0_i32, %c0_i32_0 : i32, i32
  }
  func.func @transform_6(%arg0: i32) -> (i32, i32) {
    %c0_i32 = arith.constant 0 : i32
    %c0_i32_0 = arith.constant 0 : i32
    %c0_i32_1 = arith.constant 0 : i32
    return %c0_i32, %c0_i32_0 : i32, i32
  }
  func.func @transform_7(%arg0: i32) -> (i32, i32) {
    %c0_i32 = arith.constant 0 : i32
    %c0_i32_0 = arith.constant 0 : i32
    %c0_i32_1 = arith.constant 0 : i32
    return %c0_i32, %c0_i32_0 : i32, i32
  }
  func.func @transform_8(%arg0: i32) -> (i32, i32) {
    %c0_i32 = arith.constant 0 : i32
    %c0_i32_0 = arith.constant 0 : i32
    %c0_i32_1 = arith.constant 0 : i32
    return %c0_i32, %c0_i32_0 : i32, i32
  }
  func.func @transform_9(%arg0: i32) -> (i32, i32) {
    %c0_i32 = arith.constant 0 : i32
    %c0_i32_0 = arith.constant 0 : i32
    %c0_i32_1 = arith.constant 0 : i32
    return %c0_i32, %c0_i32_0 : i32, i32
  }
  func.func @transform_10(%arg0: i32) -> (i32, i32) {
    %c0_i32 = arith.constant 0 : i32
    %c0_i32_0 = arith.constant 0 : i32
    %c0_i32_1 = arith.constant 0 : i32
    return %c0_i32, %c0_i32_0 : i32, i32
  }
  func.func @transform_11(%arg0: i32) -> (i32, i32, i32) {
    %c0_i32 = arith.constant 0 : i32
    %c0_i32_0 = arith.constant 0 : i32
    %c0_i32_1 = arith.constant 0 : i32
    return %c0_i32, %arg0, %c0_i32_0 : i32, i32, i32
  }
}

</mosaic_0001>

<llo_original>
// kernel: tpu_custom_call.1
$region0: #{tpu_custom_call.1}
  #allocation0 [shape = 'u32[]', space=smem, size = 0x4, offset = 0x4, fixed_abs, tag = 'smem constant byte address 0x4 - core index']
  #allocation1 [shape = 'u32[72,128]{1,0:T(1,128)}', space=vmem, size = 0x9000, scoped, tag = 'internal scratch']
  #allocation2 [shape = 'f32[1]{0:T(128)S(6)}', space=smem, size = 0x200, scoped, tag = 'scoped memory for tpu_custom_call.1']
  #allocation3 [shape = 'f32[1]{0:T(128)S(6)}', space=smem, size = 0x200, scoped, tag = 'scoped memory for tpu_custom_call.1']
  %s0 = inlined_call_operand.<no memory space> [shape: f32[1], index: 0, kind: input, shape index: {}]
  %s1 = inlined_call_operand.<no memory space> [shape: f32[1], index: 1, kind: input, shape index: {}]
  %s2 = inlined_call_operand.hbm [shape: f32[8,16,128], index: 2, kind: input, shape index: {}]
  %s3 = inlined_call_operand.hbm [shape: f32[8,16,128], index: 3, kind: input, shape index: {}]
  %s4 = inlined_call_operand.vmem [shape: f32[1,128], index: 4, kind: input, shape index: {}]
  %s5 = inlined_call_operand.vmem [shape: f32[1,128], index: 5, kind: input, shape index: {}]
  %s6 = inlined_call_operand.vmem [shape: f32[1,128], index: 6, kind: input, shape index: {}]
  %s7 = inlined_call_operand.hbm [shape: bf16[128,256], index: 7, kind: input, shape index: {}]
  %s8 = inlined_call_operand.vmem [shape: f32[1,256], index: 8, kind: input, shape index: {}]
  %s9 = inlined_call_operand.vmem [shape: f32[1,128], index: 9, kind: input, shape index: {}]
  %s10 = inlined_call_operand.vmem [shape: f32[1,128], index: 10, kind: input, shape index: {}]
  %s11 = inlined_call_operand.hbm [shape: f32[8,16,128], index: 11, kind: output, shape index: {}]
  %s12 = sld [smem:[#allocation0]]
  $region89: #{tpu_custom_call.1} parent=0
    _
  %s14 = ssub.s32 1, %s12
  %s15 = scalar_select 0, %s14, %s12
  %16 = sst [smem:[#allocation2]] %s0
  %17 = sst [smem:[#allocation3]] %s1
  $region1: #{tpu_custom_call.1} parent=0
    #allocation4 [shape = 'u8[65536]{0}', space=vmem, size = 0x10000, scoped, tag = 'input window, operand 2']
    #allocation5 [shape = 's32[2]{0}', space=sflag, size = 0x8, scoped, tag = 'scoped memory for tpu_custom_call.1']
    #allocation6 [shape = 's32[2]{0}', space=sflag, size = 0x8, scoped, tag = 'scoped memory for tpu_custom_call.1']
    #allocation7 [shape = 'u8[65536]{0}', space=vmem, size = 0x10000, scoped, tag = 'input window, operand 3']
    #allocation8 [shape = 's32[2]{0}', space=sflag, size = 0x8, scoped, tag = 'scoped memory for tpu_custom_call.1']
    #allocation9 [shape = 'u8[65536]{0}', space=vmem, size = 0x10000, scoped, tag = 'input window, operand 7, single buffered']
    #allocation10 [shape = 'u8[65536]{0}', space=vmem, size = 0x10000, scoped, tag = 'output window, operand 0']
    %18 = vsyncpa [#allocation5], 0
    %s19 = scalar_lea.sflag [#allocation5], 1
    %20 = vsyncpa %s19, 0
    %21 = vsyncpa [#allocation8], 0
    %s22 = scalar_lea.sflag [#allocation8], 1
    %23 = vsyncpa %s22, 0
    %24 = vsyncpa [#allocation6], 0
    %s25 = scalar_lea.sflag [#allocation6], 1
    %26 = vsyncpa %s25, 0
    loop: start=0, step=1, limit=4
    $region2: #{tpu_custom_call.1} parent=1 // loop_pre_header
      _
    $region3: #{tpu_custom_call.1} parent=1 // loop_header
      %s28 = sphi 0, %s32
      %p29 = scmp.ge.s32.totalorder %s28, 4
      %s36 = sphi 0, %s36
      %s38 = sphi 0, %s36
      %s39 = sphi 0, %s38
      %s53 = sphi 0, %s39
      %s57 = sphi 0, %s57
      %s59 = sphi 0, %s57
      %s60 = sphi 0, %s59
      %s74 = sphi 0, %s60
      %s80 = sphi 0, %s82
      %s83 = sphi 0, %s80
      %s84 = sphi 0, %s83
      %s100 = sphi 0, %s84
      %s106 = sphi 0, %s108
      %s109 = sphi 0, %s106
      %s110 = sphi 0, %s109
      %s126 = sphi 0, %s110
      %s130 = sphi 0, %s130
      %s132 = sphi 0, %s130
      %s133 = sphi 0, %s132
      %s147 = sphi 0, %s133
      %s151 = sphi 0, %s151
      %s153 = sphi 0, %s151
      %s154 = sphi 0, %s153
      %s168 = sphi 0, %s154
      %s172 = sphi 0, %s172
      %s174 = sphi 0, %s172
      %s175 = sphi 0, %s174
      %s189 = sphi 0, %s175
      %s193 = sphi 0, %s193
      %s195 = sphi 0, %s193
      %s196 = sphi 0, %s195
      %s210 = sphi 0, %s196
      %s214 = sphi 0, %s214
      %s216 = sphi 0, %s214
      %s217 = sphi 0, %s216
      %s231 = sphi 0, %s217
      %s235 = sphi 0, %s235
      %s237 = sphi 0, %s235
      %s238 = sphi 0, %s237
      %s252 = sphi 0, %s238
      %s256 = sphi 0, %s256
      %s258 = sphi 0, %s256
      %s259 = sphi 0, %s258
      %s273 = sphi 0, %s259
      %s279 = sphi 0, %s281
      %s282 = sphi 0, %s279
      %s283 = sphi 0, %s282
      %s299 = sphi 0, %s283
    $region4: #{tpu_custom_call.1} parent=1 // loop_header_branch
      %31 = sbr.rel (%p29) target = $region8
    $region5: #{tpu_custom_call.1} parent=1 // loop_body
      %s33 = ssub.s32 %s28, 1
      %s34 = ssub.s32 %s28, 2
      %s35 = sadd.s32 %s28, 1
      %s37 = sadd.s32 %s36, 1
      %p40 = scmp.eq.s32.totalorder %s28, 1
      %p41 = scmp.ne.s32.totalorder %s36, %s38
      %p42 = scmp.eq.s32.totalorder %s28, 0
      %p43 = por %p41, %p42
      %p44 = scmp.ne.s32.totalorder %s36, %s38
      %p45 = scmp.eq.s32.totalorder %s33, 1
      %p46 = por %p44, %p45
      %p47 = scmp.ne.s32.totalorder %s38, %s39
      %p48 = scmp.eq.s32.totalorder %s33, 0
      %p49 = por %p47, %p48
      %p50 = scmp.ne.s32.totalorder %s38, %s39
      %p51 = scmp.eq.s32.totalorder %s34, 1
      %p52 = por %p50, %p51
      %p54 = scmp.ne.s32.totalorder %s39, %s53
      %p55 = scmp.eq.s32.totalorder %s34, 0
      %p56 = por %p54, %p55
      %s58 = sadd.s32 %s57, 1
      %p61 = scmp.eq.s32.totalorder %s28, 1
      %p62 = scmp.ne.s32.totalorder %s57, %s59
      %p63 = scmp.eq.s32.totalorder %s28, 0
      %p64 = por %p62, %p63
      %p65 = scmp.ne.s32.totalorder %s57, %s59
      %p66 = scmp.eq.s32.totalorder %s33, 1
      %p67 = por %p65, %p66
      %p68 = scmp.ne.s32.totalorder %s59, %s60
      %p69 = scmp.eq.s32.totalorder %s33, 0
      %p70 = por %p68, %p69
      %p71 = scmp.ne.s32.totalorder %s59, %s60
      %p72 = scmp.eq.s32.totalorder %s34, 1
      %p73 = por %p71, %p72
      %p75 = scmp.ne.s32.totalorder %s60, %s74
      %p76 = scmp.eq.s32.totalorder %s34, 0
      %p77 = por %p75, %p76
      %s78 = ssub.s32 %s28, %s35
      %p79 = scmp.eq.s32.totalorder %s78, 0
      %s81 = sadd.s32 %s80, 1
      %s82 = scalar_select %p79, %s80, %s81
      %p85 = pneg %p79
      %p86 = scmp.eq.s32.totalorder %s28, 1
      %p87 = por %p85, %p86
      %p88 = scmp.ne.s32.totalorder %s80, %s83
      %p89 = scmp.eq.s32.totalorder %s28, 0
      %p90 = por %p88, %p89
      %p91 = scmp.ne.s32.totalorder %s80, %s83
      %p92 = scmp.eq.s32.totalorder %s33, 1
      %p93 = por %p91, %p92
      %p94 = scmp.ne.s32.totalorder %s83, %s84
      %p95 = scmp.eq.s32.totalorder %s33, 0
      %p96 = por %p94, %p95
      %p97 = scmp.ne.s32.totalorder %s83, %s84
      %p98 = scmp.eq.s32.totalorder %s34, 1
      %p99 = por %p97, %p98
      %p101 = scmp.ne.s32.totalorder %s84, %s100
      %p102 = scmp.eq.s32.totalorder %s34, 0
      %p103 = por %p101, %p102
      %s104 = ssub.s32 %s28, %s35
      %p105 = scmp.eq.s32.totalorder %s104, 0
      %s107 = sadd.s32 %s106, 1
      %s108 = scalar_select %p105, %s106, %s107
      %p111 = pneg %p105
      %p112 = scmp.eq.s32.totalorder %s28, 1
      %p113 = por %p111, %p112
      %p114 = scmp.ne.s32.totalorder %s106, %s109
      %p115 = scmp.eq.s32.totalorder %s28, 0
      %p116 = por %p114, %p115
      %p117 = scmp.ne.s32.totalorder %s106, %s109
      %p118 = scmp.eq.s32.totalorder %s33, 1
      %p119 = por %p117, %p118
      %p120 = scmp.ne.s32.totalorder %s109, %s110
      %p121 = scmp.eq.s32.totalorder %s33, 0
      %p122 = por %p120, %p121
      %p123 = scmp.ne.s32.totalorder %s109, %s110
      %p124 = scmp.eq.s32.totalorder %s34, 1
      %p125 = por %p123, %p124
      %p127 = scmp.ne.s32.totalorder %s110, %s126
      %p128 = scmp.eq.s32.totalorder %s34, 0
      %p129 = por %p127, %p128
      %s131 = sadd.s32 %s130, 1
      %p134 = scmp.eq.s32.totalorder %s28, 1
      %p135 = scmp.ne.s32.totalorder %s130, %s132
      %p136 = scmp.eq.s32.totalorder %s28, 0
      %p137 = por %p135, %p136
      %p138 = scmp.ne.s32.totalorder %s130, %s132
      %p139 = scmp.eq.s32.totalorder %s33, 1
      %p140 = por %p138, %p139
      %p141 = scmp.ne.s32.totalorder %s132, %s133
      %p142 = scmp.eq.s32.totalorder %s33, 0
      %p143 = por %p141, %p142
      %p144 = scmp.ne.s32.totalorder %s132, %s133
      %p145 = scmp.eq.s32.totalorder %s34, 1
      %p146 = por %p144, %p145
      %p148 = scmp.ne.s32.totalorder %s133, %s147
      %p149 = scmp.eq.s32.totalorder %s34, 0
      %p150 = por %p148, %p149
      %s152 = sadd.s32 %s151, 1
      %p155 = scmp.eq.s32.totalorder %s28, 1
      %p156 = scmp.ne.s32.totalorder %s151, %s153
      %p157 = scmp.eq.s32.totalorder %s28, 0
      %p158 = por %p156, %p157
      %p159 = scmp.ne.s32.totalorder %s151, %s153
      %p160 = scmp.eq.s32.totalorder %s33, 1
      %p161 = por %p159, %p160
      %p162 = scmp.ne.s32.totalorder %s153, %s154
      %p163 = scmp.eq.s32.totalorder %s33, 0
      %p164 = por %p162, %p163
      %p165 = scmp.ne.s32.totalorder %s153, %s154
      %p166 = scmp.eq.s32.totalorder %s34, 1
      %p167 = por %p165, %p166
      %p169 = scmp.ne.s32.totalorder %s154, %s168
      %p170 = scmp.eq.s32.totalorder %s34, 0
      %p171 = por %p169, %p170
      %s173 = sadd.s32 %s172, 1
      %p176 = scmp.eq.s32.totalorder %s28, 1
      %p177 = scmp.ne.s32.totalorder %s172, %s174
      %p178 = scmp.eq.s32.totalorder %s28, 0
      %p179 = por %p177, %p178
      %p180 = scmp.ne.s32.totalorder %s172, %s174
      %p181 = scmp.eq.s32.totalorder %s33, 1
      %p182 = por %p180, %p181
      %p183 = scmp.ne.s32.totalorder %s174, %s175
      %p184 = scmp.eq.s32.totalorder %s33, 0
      %p185 = por %p183, %p184
      %p186 = scmp.ne.s32.totalorder %s174, %s175
      %p187 = scmp.eq.s32.totalorder %s34, 1
      %p188 = por %p186, %p187
      %p190 = scmp.ne.s32.totalorder %s175, %s189
      %p191 = scmp.eq.s32.totalorder %s34, 0
      %p192 = por %p190, %p191
      %s194 = sadd.s32 %s193, 1
      %p197 = scmp.eq.s32.totalorder %s28, 1
      %p198 = scmp.ne.s32.totalorder %s193, %s195
      %p199 = scmp.eq.s32.totalorder %s28, 0
      %p200 = por %p198, %p199
      %p201 = scmp.ne.s32.totalorder %s193, %s195
      %p202 = scmp.eq.s32.totalorder %s33, 1
      %p203 = por %p201, %p202
      %p204 = scmp.ne.s32.totalorder %s195, %s196
      %p205 = scmp.eq.s32.totalorder %s33, 0
      %p206 = por %p204, %p205
      %p207 = scmp.ne.s32.totalorder %s195, %s196
      %p208 = scmp.eq.s32.totalorder %s34, 1
      %p209 = por %p207, %p208
      %p211 = scmp.ne.s32.totalorder %s196, %s210
      %p212 = scmp.eq.s32.totalorder %s34, 0
      %p213 = por %p211, %p212
      %s215 = sadd.s32 %s214, 1
      %p218 = scmp.eq.s32.totalorder %s28, 1
      %p219 = scmp.ne.s32.totalorder %s214, %s216
      %p220 = scmp.eq.s32.totalorder %s28, 0
      %p221 = por %p219, %p220
      %p222 = scmp.ne.s32.totalorder %s214, %s216
      %p223 = scmp.eq.s32.totalorder %s33, 1
      %p224 = por %p222, %p223
      %p225 = scmp.ne.s32.totalorder %s216, %s217
      %p226 = scmp.eq.s32.totalorder %s33, 0
      %p227 = por %p225, %p226
      %p228 = scmp.ne.s32.totalorder %s216, %s217
      %p229 = scmp.eq.s32.totalorder %s34, 1
      %p230 = por %p228, %p229
      %p232 = scmp.ne.s32.totalorder %s217, %s231
      %p233 = scmp.eq.s32.totalorder %s34, 0
      %p234 = por %p232, %p233
      %s236 = sadd.s32 %s235, 1
      %p239 = scmp.eq.s32.totalorder %s28, 1
      %p240 = scmp.ne.s32.totalorder %s235, %s237
      %p241 = scmp.eq.s32.totalorder %s28, 0
      %p242 = por %p240, %p241
      %p243 = scmp.ne.s32.totalorder %s235, %s237
      %p244 = scmp.eq.s32.totalorder %s33, 1
      %p245 = por %p243, %p244
      %p246 = scmp.ne.s32.totalorder %s237, %s238
      %p247 = scmp.eq.s32.totalorder %s33, 0
      %p248 = por %p246, %p247
      %p249 = scmp.ne.s32.totalorder %s237, %s238
      %p250 = scmp.eq.s32.totalorder %s34, 1
      %p251 = por %p249, %p250
      %p253 = scmp.ne.s32.totalorder %s238, %s252
      %p254 = scmp.eq.s32.totalorder %s34, 0
      %p255 = por %p253, %p254
      %s257 = sadd.s32 %s256, 1
      %p260 = scmp.eq.s32.totalorder %s28, 1
      %p261 = scmp.ne.s32.totalorder %s256, %s258
      %p262 = scmp.eq.s32.totalorder %s28, 0
      %p263 = por %p261, %p262
      %p264 = scmp.ne.s32.totalorder %s256, %s258
      %p265 = scmp.eq.s32.totalorder %s33, 1
      %p266 = por %p264, %p265
      %p267 = scmp.ne.s32.totalorder %s258, %s259
      %p268 = scmp.eq.s32.totalorder %s33, 0
      %p269 = por %p267, %p268
      %p270 = scmp.ne.s32.totalorder %s258, %s259
      %p271 = scmp.eq.s32.totalorder %s34, 1
      %p272 = por %p270, %p271
      %p274 = scmp.ne.s32.totalorder %s259, %s273
      %p275 = scmp.eq.s32.totalorder %s34, 0
      %p276 = por %p274, %p275
      %s277 = ssub.s32 %s28, %s35
      %p278 = scmp.eq.s32.totalorder %s277, 0
      %s280 = sadd.s32 %s279, 1
      %s281 = scalar_select %p278, %s279, %s280
      %p284 = pneg %p278
      %p285 = scmp.eq.s32.totalorder %s28, 1
      %p286 = por %p284, %p285
      %p287 = scmp.ne.s32.totalorder %s279, %s282
      %p288 = scmp.eq.s32.totalorder %s28, 0
      %p289 = por %p287, %p288
      %p290 = scmp.ne.s32.totalorder %s279, %s282
      %p291 = scmp.eq.s32.totalorder %s33, 1
      %p292 = por %p290, %p291
      %p293 = scmp.ne.s32.totalorder %s282, %s283
      %p294 = scmp.eq.s32.totalorder %s33, 0
      %p295 = por %p293, %p294
      %p296 = scmp.ne.s32.totalorder %s282, %s283
      %p297 = scmp.eq.s32.totalorder %s34, 1
      %p298 = por %p296, %p297
      %p300 = scmp.ne.s32.totalorder %s283, %s299
      %p301 = scmp.eq.s32.totalorder %s34, 0
      %p302 = por %p300, %p301
      %p303 = scmp.le.s32.totalorder 1, %s28
      %p304 = scmp.lt.s32.totalorder %s28, 3
      %p305 = pnand %p303, %p304
      %p306 = pneg %p305
      // Predicated region
      $region9: #{tpu_custom_call.1} parent=5 // pred_check
        _
      $region10: #{tpu_custom_call.1} parent=5 // pred_check_branch
        %308 = sbr.rel (%p305) target = $region12
      $region11: #{tpu_custom_call.1} parent=5 // pred_region
        %s309 = ssub.s32 %s28, 1
        // Predicated region
        $region13: #{tpu_custom_call.1} parent=11 // pred_check
          %p310 = pneg %p49
        $region14: #{tpu_custom_call.1} parent=11 // pred_check_branch
          %312 = sbr.rel (%p310) target = $region16
        $region15: #{tpu_custom_call.1} parent=11 // pred_region
          _
        $region16: #{tpu_custom_call.1} parent=11 // pred_fallthru
          _
        // Predicated region
        $region17: #{tpu_custom_call.1} parent=11 // pred_check
          %p313 = pneg %p70
        $region18: #{tpu_custom_call.1} parent=11 // pred_check_branch
          %315 = sbr.rel (%p313) target = $region20
        $region19: #{tpu_custom_call.1} parent=11 // pred_region
          _
        $region20: #{tpu_custom_call.1} parent=11 // pred_fallthru
          _
        // Predicated region
        $region21: #{tpu_custom_call.1} parent=11 // pred_check
          %p316 = pneg %p143
        $region22: #{tpu_custom_call.1} parent=11 // pred_check_branch
          %318 = sbr.rel (%p316) target = $region24
        $region23: #{tpu_custom_call.1} parent=11 // pred_region
          _
        $region24: #{tpu_custom_call.1} parent=11 // pred_fallthru
          _
        // Predicated region
        $region25: #{tpu_custom_call.1} parent=11 // pred_check
          %p319 = pneg %p164
        $region26: #{tpu_custom_call.1} parent=11 // pred_check_branch
          %321 = sbr.rel (%p319) target = $region28
        $region27: #{tpu_custom_call.1} parent=11 // pred_region
          _
        $region28: #{tpu_custom_call.1} parent=11 // pred_fallthru
          _
        // Predicated region
        $region29: #{tpu_custom_call.1} parent=11 // pred_check
          %p322 = pneg %p185
        $region30: #{tpu_custom_call.1} parent=11 // pred_check_branch
          %324 = sbr.rel (%p322) target = $region32
        $region31: #{tpu_custom_call.1} parent=11 // pred_region
          _
        $region32: #{tpu_custom_call.1} parent=11 // pred_fallthru
          _
        // Predicated region
        $region33: #{tpu_custom_call.1} parent=11 // pred_check
          %p325 = pneg %p206
        $region34: #{tpu_custom_call.1} parent=11 // pred_check_branch
          %327 = sbr.rel (%p325) target = $region36
        $region35: #{tpu_custom_call.1} parent=11 // pred_region
          %329 = vsyncadd [#allocation8], 0
          %s330 = sshll.u32 %s7, 4
          %s331 = int_to_ptr.hbm [resolvable:$true] %s330
          %s332 = sshll.u32 [#allocation9], 4
          %s333 = int_to_ptr.vmem [resolvable:$true] %s332
          %338 = dma.hbm_to_vmem [thread:$0]  %s331, 2048, %s333, [#allocation8], 128, 128, 8
        $region36: #{tpu_custom_call.1} parent=11 // pred_fallthru
          _
        // Predicated region
        $region37: #{tpu_custom_call.1} parent=11 // pred_check
          %p339 = pneg %p227
        $region38: #{tpu_custom_call.1} parent=11 // pred_check_branch
          %341 = sbr.rel (%p339) target = $region40
        $region39: #{tpu_custom_call.1} parent=11 // pred_region
          _
        $region40: #{tpu_custom_call.1} parent=11 // pred_fallthru
          _
        // Predicated region
        $region41: #{tpu_custom_call.1} parent=11 // pred_check
          %p342 = pneg %p248
        $region42: #{tpu_custom_call.1} parent=11 // pred_check_branch
          %344 = sbr.rel (%p342) target = $region44
        $region43: #{tpu_custom_call.1} parent=11 // pred_region
          _
        $region44: #{tpu_custom_call.1} parent=11 // pred_fallthru
          _
        // Predicated region
        $region45: #{tpu_custom_call.1} parent=11 // pred_check
          %p345 = pneg %p269
        $region46: #{tpu_custom_call.1} parent=11 // pred_check_branch
          %347 = sbr.rel (%p345) target = $region48
        $region47: #{tpu_custom_call.1} parent=11 // pred_region
          _
        $region48: #{tpu_custom_call.1} parent=11 // pred_fallthru
          _
      $region12: #{tpu_custom_call.1} parent=5 // pred_fallthru
        _
      %p348 = scmp.lt.s32.totalorder %s28, 2
      // Predicated region
      $region49: #{tpu_custom_call.1} parent=5 // pred_check
        %p349 = pneg %p348
      $region50: #{tpu_custom_call.1} parent=5 // pred_check_branch
        %351 = sbr.rel (%p349) target = $region52
      $region51: #{tpu_custom_call.1} parent=5 // pred_region
        // Predicated region
        $region53: #{tpu_custom_call.1} parent=51 // pred_check
          %p352 = pneg %p90
        $region54: #{tpu_custom_call.1} parent=51 // pred_check_branch
          %354 = sbr.rel (%p352) target = $region56
        $region55: #{tpu_custom_call.1} parent=51 // pred_region
          %s355 = sand.u32 %s80, 1
          %s356 = scalar_lea.sflag [#allocation5], %s355
          %s357 = sand.u32 %s80, 1
          %s358 = smul.addr %s357, 64
          %s359 = scalar_lea.vmem [#allocation4], %s358
          %361 = vsyncadd %s356, 0
          %s362 = smul.addr %s28, 8
          %s363 = scalar_lea.hbm %s2, %s362
          %s364 = sshll.u32 %s363, 4
          %s365 = int_to_ptr.hbm [resolvable:$true] %s364
          %s366 = sshll.u32 %s359, 4
          %s367 = int_to_ptr.vmem [resolvable:$true] %s366
          %372 = dma.hbm_to_vmem [thread:$0]  %s365, 1024, %s367, %s356, 256, 128, 8
        $region56: #{tpu_custom_call.1} parent=51 // pred_fallthru
          _
        // Predicated region
        $region57: #{tpu_custom_call.1} parent=51 // pred_check
          %p373 = pneg %p116
        $region58: #{tpu_custom_call.1} parent=51 // pred_check_branch
          %375 = sbr.rel (%p373) target = $region60
        $region59: #{tpu_custom_call.1} parent=51 // pred_region
          %s376 = sand.u32 %s28, 1
          %s377 = scalar_lea.sflag [#allocation8], %s376
          %s378 = sand.u32 %s106, 1
          %s379 = smul.addr %s378, 64
          %s380 = scalar_lea.vmem [#allocation7], %s379
          %382 = vsyncadd %s377, 0
          %s383 = smul.addr %s28, 8
          %s384 = scalar_lea.hbm %s3, %s383
          %s385 = sshll.u32 %s384, 4
          %s386 = int_to_ptr.hbm [resolvable:$true] %s385
          %s387 = sshll.u32 %s380, 4
          %s388 = int_to_ptr.vmem [resolvable:$true] %s387
          %393 = dma.hbm_to_vmem [thread:$0]  %s386, 1024, %s388, %s377, 256, 128, 8
        $region60: #{tpu_custom_call.1} parent=51 // pred_fallthru
          _
      $region52: #{tpu_custom_call.1} parent=5 // pred_fallthru
        _
      %p394 = scmp.le.s32.totalorder 1, %s28
      %p395 = scmp.lt.s32.totalorder %s28, 3
      %p396 = pnand %p394, %p395
      %p397 = pneg %p396
      // Predicated region
      $region61: #{tpu_custom_call.1} parent=5 // pred_check
        _
      $region62: #{tpu_custom_call.1} parent=5 // pred_check_branch
        %399 = sbr.rel (%p396) target = $region64
      $region63: #{tpu_custom_call.1} parent=5 // pred_region
        %s400 = ssub.s32 %s28, 1
        %s401 = sand.u32 %s83, 1
        %s402 = scalar_lea.sflag [#allocation5], %s401
        %s403 = sand.u32 %s83, 1
        %s404 = smul.addr %s403, 64
        %s405 = scalar_lea.vmem [#allocation4], %s404
        // Predicated region
        $region65: #{tpu_custom_call.1} parent=63 // pred_check
          %p406 = pneg %p96
        $region66: #{tpu_custom_call.1} parent=63 // pred_check_branch
          %408 = sbr.rel (%p406) target = $region68
        $region67: #{tpu_custom_call.1} parent=63 // pred_region
          %410 = dma.done %s402, 1024
        $region68: #{tpu_custom_call.1} parent=63 // pred_fallthru
          _
        %s411 = sand.u32 %s33, 1
        %s412 = scalar_lea.sflag [#allocation8], %s411
        %s413 = sand.u32 %s109, 1
        %s414 = smul.addr %s413, 64
        %s415 = scalar_lea.vmem [#allocation7], %s414
        // Predicated region
        $region69: #{tpu_custom_call.1} parent=63 // pred_check
          %p416 = pneg %p122
        $region70: #{tpu_custom_call.1} parent=63 // pred_check_branch
          %418 = sbr.rel (%p416) target = $region72
        $region71: #{tpu_custom_call.1} parent=63 // pred_region
          %420 = dma.done %s412, 1024
        $region72: #{tpu_custom_call.1} parent=63 // pred_fallthru
          _
        // Predicated region
        $region73: #{tpu_custom_call.1} parent=63 // pred_check
          %p421 = pneg %p206
        $region74: #{tpu_custom_call.1} parent=63 // pred_check_branch
          %423 = sbr.rel (%p421) target = $region76
        $region75: #{tpu_custom_call.1} parent=63 // pred_region
          %425 = dma.done [#allocation8], 2048
        $region76: #{tpu_custom_call.1} parent=63 // pred_fallthru
          _
        %p426 = pneg %p49
        %p427 = pneg %p46
        %p428 = pneg %p70
        %p429 = pneg %p67
        %s430 = sand.u32 %s83, 1
        %s431 = scalar_lea.sflag [#allocation5], %s430
        %s432 = sand.u32 %s83, 1
        %s433 = smul.addr %s432, 64
        %s434 = scalar_lea.vmem [#allocation4], %s433
        %p435 = pneg %p96
        %p436 = pneg %p93
        %s437 = sand.u32 %s33, 1
        %s438 = scalar_lea.sflag [#allocation8], %s437
        %s439 = sand.u32 %s109, 1
        %s440 = smul.addr %s439, 64
        %s441 = scalar_lea.vmem [#allocation7], %s440
        %p442 = pneg %p122
        %p443 = pneg %p119
        %p444 = pneg %p143
        %p445 = pneg %p140
        %p446 = pneg %p164
        %p447 = pneg %p161
        %p448 = pneg %p185
        %p449 = pneg %p182
        %p450 = pneg %p206
        %p451 = pneg %p203
        %p452 = pneg %p227
        %p453 = pneg %p224
        %p454 = pneg %p248
        %p455 = pneg %p245
        %p456 = pneg %p269
        %p457 = pneg %p266
        %p458 = pneg %p295
        %p459 = pneg %p292
        %s460 = sand.u32 %s282, 1
        %s461 = scalar_lea.sflag [#allocation6], %s460
        %s462 = sand.u32 %s282, 1
        %s463 = smul.addr %s462, 64
        %s464 = scalar_lea.vmem [#allocation10], %s463
        %s465 = sld [smem:[#allocation2]]
        %s466 = sld [smem:[#allocation3]]
        %v467 = vld [vmem:[%s405] sm:$0xff]
        %v468 = vld [vmem:[%s405 + $0x8] sm:$0xff]
        %v469 = vld [vmem:[%s405 + $0x10] sm:$0xff]
        %v470 = vld [vmem:[%s405 + $0x18] sm:$0xff]
        %v471 = vld [vmem:[%s405 + $0x20] sm:$0xff]
        %v472 = vld [vmem:[%s405 + $0x28] sm:$0xff]
        %v473 = vld [vmem:[%s405 + $0x30] sm:$0xff]
        %v474 = vld [vmem:[%s405 + $0x38] sm:$0xff]
        %v475 = vld [vmem:[%s415] sm:$0xff]
        %v476 = vld [vmem:[%s415 + $0x8] sm:$0xff]
        %v477 = vld [vmem:[%s415 + $0x10] sm:$0xff]
        %v478 = vld [vmem:[%s415 + $0x18] sm:$0xff]
        %v479 = vld [vmem:[%s415 + $0x20] sm:$0xff]
        %v480 = vld [vmem:[%s415 + $0x28] sm:$0xff]
        %v481 = vld [vmem:[%s415 + $0x30] sm:$0xff]
        %v482 = vld [vmem:[%s415 + $0x38] sm:$0xff]
        %v483 = vlaneseq
        %v484 = vand.u32 %v483, 127
        %vm485 = vcmp.lt.s32.totalorder %v484, 50
        %v486 = vsel %vm485, 1, 0
        %v487 = vcvt.s32.f32 %v486
        %v488 = vstv %s465
        %v489 = vmul.f32 %v488, %v467
        %v490 = vmul.f32 %v488, %v468
        %v491 = vmul.f32 %v488, %v469
        %v492 = vmul.f32 %v488, %v470
        %v493 = vmul.f32 %v488, %v471
        %v494 = vmul.f32 %v488, %v472
        %v495 = vmul.f32 %v488, %v473
        %v496 = vmul.f32 %v488, %v474
        %s497 = ssub.f32 1.0, %s465
        %v498 = vstv %s497
        %v499 = vmul.f32 %v498, %v475
        %v500 = vmul.f32 %v498, %v476
        %v501 = vmul.f32 %v498, %v477
        %v502 = vmul.f32 %v498, %v478
        %v503 = vmul.f32 %v498, %v479
        %v504 = vmul.f32 %v498, %v480
        %v505 = vmul.f32 %v498, %v481
        %v506 = vmul.f32 %v498, %v482
        %v507 = vadd.f32 %v489, %v499
        %v508 = vadd.f32 %v490, %v500
        %v509 = vadd.f32 %v491, %v501
        %v510 = vadd.f32 %v492, %v502
        %v511 = vadd.f32 %v493, %v503
        %v512 = vadd.f32 %v494, %v504
        %v513 = vadd.f32 %v495, %v505
        %v514 = vadd.f32 %v496, %v506
        %v515 = vld [vmem:[%s4] sm:$0x1]
        %v517 = vperm.slane %v515, 0
        %v519 = vmul.f32 %v507, %v517
        %v520 = vmul.f32 %v508, %v517
        %v521 = vmul.f32 %v509, %v517
        %v522 = vmul.f32 %v510, %v517
        %v523 = vmul.f32 %v511, %v517
        %v524 = vmul.f32 %v512, %v517
        %v525 = vmul.f32 %v513, %v517
        %v526 = vmul.f32 %v514, %v517
        %527 = vadd.xlane.f32.xlu0 %v519
        %v528 = vpop.xlane.xlu0 %527
        %529 = vadd.xlane.f32.xlu0 %v520
        %v530 = vpop.xlane.xlu0 %529
        %531 = vadd.xlane.f32.xlu0 %v521
        %v532 = vpop.xlane.xlu0 %531
        %533 = vadd.xlane.f32.xlu0 %v522
        %v534 = vpop.xlane.xlu0 %533
        %535 = vadd.xlane.f32.xlu0 %v523
        %v536 = vpop.xlane.xlu0 %535
        %537 = vadd.xlane.f32.xlu0 %v524
        %v538 = vpop.xlane.xlu0 %537
        %539 = vadd.xlane.f32.xlu0 %v525
        %v540 = vpop.xlane.xlu0 %539
        %541 = vadd.xlane.f32.xlu0 %v526
        %v542 = vpop.xlane.xlu0 %541
        %v543 = vstv %s466
        %v544 = vadd.f32 %v528, %v543
        %v545 = vadd.f32 %v530, %v543
        %v546 = vadd.f32 %v532, %v543
        %v547 = vadd.f32 %v534, %v543
        %v548 = vadd.f32 %v536, %v543
        %v549 = vadd.f32 %v538, %v543
        %v550 = vadd.f32 %v540, %v543
        %v551 = vadd.f32 %v542, %v543
        %v552 = vxor.u32 %v544, 2147483648
        %v553 = vxor.u32 %v545, 2147483648
        %v554 = vxor.u32 %v546, 2147483648
        %v555 = vxor.u32 %v547, 2147483648
        %v556 = vxor.u32 %v548, 2147483648
        %v557 = vxor.u32 %v549, 2147483648
        %v558 = vxor.u32 %v550, 2147483648
        %v559 = vxor.u32 %v551, 2147483648
        %v560 = vmul.f32 %v552, 1.442695
        %v561 = vpow.pop %v560
        %v562 = vmul.f32 %v553, 1.442695
        %v563 = vpow.pop %v562
        %v564 = vmul.f32 %v554, 1.442695
        %v565 = vpow.pop %v564
        %v566 = vmul.f32 %v555, 1.442695
        %v567 = vpow.pop %v566
        %v568 = vmul.f32 %v556, 1.442695
        %v569 = vpow.pop %v568
        %v570 = vmul.f32 %v557, 1.442695
        %v571 = vpow.pop %v570
        %v572 = vmul.f32 %v558, 1.442695
        %v573 = vpow.pop %v572
        %v574 = vmul.f32 %v559, 1.442695
        %v575 = vpow.pop %v574
        %v576 = vadd.f32 %v561, 1.0
        %v577 = vadd.f32 %v563, 1.0
        %v578 = vadd.f32 %v565, 1.0
        %v579 = vadd.f32 %v567, 1.0
        %v580 = vadd.f32 %v569, 1.0
        %v581 = vadd.f32 %v571, 1.0
        %v582 = vadd.f32 %v573, 1.0
        %v583 = vadd.f32 %v575, 1.0
        %v584 = vrcp.pop %v576
        %v585 = vmul.f32 %v576, %v584
        %v586 = vsub.f32 1.0, %v585
        %v587 = vmul.f32 %v584, %v586
        %v588 = vadd.f32 %v584, %v587
        %vm589 = vweird.f32 %v576
        %vm590 = vweird.f32 %v584
        %vm591 = vmor %vm589, %vm590
        %v592 = vsel %vm591, %v584, %v588
        %v593 = vand.u32 2147483647, %v576
        %vm594 = vcmp.eq.f32.partialorder %v593, 8.507059e+37
        %v595 = vand.u32 %v576, 2147483648
        %v596 = vor.u32 1.1754944e-38, %v595
        %v597 = vsel %vm594, %v596, %v592
        %v598 = vmul.f32 1.0, %v597
        %v599 = vrcp.pop %v577
        %v600 = vmul.f32 %v577, %v599
        %v601 = vsub.f32 1.0, %v600
        %v602 = vmul.f32 %v599, %v601
        %v603 = vadd.f32 %v599, %v602
        %vm604 = vweird.f32 %v577
        %vm605 = vweird.f32 %v599
        %vm606 = vmor %vm604, %vm605
        %v607 = vsel %vm606, %v599, %v603
        %v608 = vand.u32 2147483647, %v577
        %vm609 = vcmp.eq.f32.partialorder %v608, 8.507059e+37
        %v610 = vand.u32 %v577, 2147483648
        %v611 = vor.u32 1.1754944e-38, %v610
        %v612 = vsel %vm609, %v611, %v607
        %v613 = vmul.f32 1.0, %v612
        %v614 = vrcp.pop %v578
        %v615 = vmul.f32 %v578, %v614
        %v616 = vsub.f32 1.0, %v615
        %v617 = vmul.f32 %v614, %v616
        %v618 = vadd.f32 %v614, %v617
        %vm619 = vweird.f32 %v578
        %vm620 = vweird.f32 %v614
        %vm621 = vmor %vm619, %vm620
        %v622 = vsel %vm621, %v614, %v618
        %v623 = vand.u32 2147483647, %v578
        %vm624 = vcmp.eq.f32.partialorder %v623, 8.507059e+37
        %v625 = vand.u32 %v578, 2147483648
        %v626 = vor.u32 1.1754944e-38, %v625
        %v627 = vsel %vm624, %v626, %v622
        %v628 = vmul.f32 1.0, %v627
        %v629 = vrcp.pop %v579
        %v630 = vmul.f32 %v579, %v629
        %v631 = vsub.f32 1.0, %v630
        %v632 = vmul.f32 %v629, %v631
        %v633 = vadd.f32 %v629, %v632
        %vm634 = vweird.f32 %v579
        %vm635 = vweird.f32 %v629
        %vm636 = vmor %vm634, %vm635
        %v637 = vsel %vm636, %v629, %v633
        %v638 = vand.u32 2147483647, %v579
        %vm639 = vcmp.eq.f32.partialorder %v638, 8.507059e+37
        %v640 = vand.u32 %v579, 2147483648
        %v641 = vor.u32 1.1754944e-38, %v640
        %v642 = vsel %vm639, %v641, %v637
        %v643 = vmul.f32 1.0, %v642
        %v644 = vrcp.pop %v580
        %v645 = vmul.f32 %v580, %v644
        %v646 = vsub.f32 1.0, %v645
        %v647 = vmul.f32 %v644, %v646
        %v648 = vadd.f32 %v644, %v647
        %vm649 = vweird.f32 %v580
        %vm650 = vweird.f32 %v644
        %vm651 = vmor %vm649, %vm650
        %v652 = vsel %vm651, %v644, %v648
        %v653 = vand.u32 2147483647, %v580
        %vm654 = vcmp.eq.f32.partialorder %v653, 8.507059e+37
        %v655 = vand.u32 %v580, 2147483648
        %v656 = vor.u32 1.1754944e-38, %v655
        %v657 = vsel %vm654, %v656, %v652
        %v658 = vmul.f32 1.0, %v657
        %v659 = vrcp.pop %v581
        %v660 = vmul.f32 %v581, %v659
        %v661 = vsub.f32 1.0, %v660
        %v662 = vmul.f32 %v659, %v661
        %v663 = vadd.f32 %v659, %v662
        %vm664 = vweird.f32 %v581
        %vm665 = vweird.f32 %v659
        %vm666 = vmor %vm664, %vm665
        %v667 = vsel %vm666, %v659, %v663
        %v668 = vand.u32 2147483647, %v581
        %vm669 = vcmp.eq.f32.partialorder %v668, 8.507059e+37
        %v670 = vand.u32 %v581, 2147483648
        %v671 = vor.u32 1.1754944e-38, %v670
        %v672 = vsel %vm669, %v671, %v667
        %v673 = vmul.f32 1.0, %v672
        %v674 = vrcp.pop %v582
        %v675 = vmul.f32 %v582, %v674
        %v676 = vsub.f32 1.0, %v675
        %v677 = vmul.f32 %v674, %v676
        %v678 = vadd.f32 %v674, %v677
        %vm679 = vweird.f32 %v582
        %vm680 = vweird.f32 %v674
        %vm681 = vmor %vm679, %vm680
        %v682 = vsel %vm681, %v674, %v678
        %v683 = vand.u32 2147483647, %v582
        %vm684 = vcmp.eq.f32.partialorder %v683, 8.507059e+37
        %v685 = vand.u32 %v582, 2147483648
        %v686 = vor.u32 1.1754944e-38, %v685
        %v687 = vsel %vm684, %v686, %v682
        %v688 = vmul.f32 1.0, %v687
        %v689 = vrcp.pop %v583
        %v690 = vmul.f32 %v583, %v689
        %v691 = vsub.f32 1.0, %v690
        %v692 = vmul.f32 %v689, %v691
        %v693 = vadd.f32 %v689, %v692
        %vm694 = vweird.f32 %v583
        %vm695 = vweird.f32 %v689
        %vm696 = vmor %vm694, %vm695
        %v697 = vsel %vm696, %v689, %v693
        %v698 = vand.u32 2147483647, %v583
        %vm699 = vcmp.eq.f32.partialorder %v698, 8.507059e+37
        %v700 = vand.u32 %v583, 2147483648
        %v701 = vor.u32 1.1754944e-38, %v700
        %v702 = vsel %vm699, %v701, %v697
        %v703 = vmul.f32 1.0, %v702
        %v704 = vmul.f32 %v507, 1.442695
        %v705 = vpow.pop %v704
        %v706 = vmul.f32 %v508, 1.442695
        %v707 = vpow.pop %v706
        %v708 = vmul.f32 %v509, 1.442695
        %v709 = vpow.pop %v708
        %v710 = vmul.f32 %v510, 1.442695
        %v711 = vpow.pop %v710
        %v712 = vmul.f32 %v511, 1.442695
        %v713 = vpow.pop %v712
        %v714 = vmul.f32 %v512, 1.442695
        %v715 = vpow.pop %v714
        %v716 = vmul.f32 %v513, 1.442695
        %v717 = vpow.pop %v716
        %v718 = vmul.f32 %v514, 1.442695
        %v719 = vpow.pop %v718
        %v720 = vmul.f32 %v705, %v487
        %v721 = vmul.f32 %v707, %v487
        %v722 = vmul.f32 %v709, %v487
        %v723 = vmul.f32 %v711, %v487
        %v724 = vmul.f32 %v713, %v487
        %v725 = vmul.f32 %v715, %v487
        %v726 = vmul.f32 %v717, %v487
        %v727 = vmul.f32 %v719, %v487
        %728 = vadd.xlane.f32.xlu0 %v720
        %v729 = vpop.xlane.xlu0 %728
        %730 = vadd.xlane.f32.xlu0 %v721
        %v731 = vpop.xlane.xlu0 %730
        %732 = vadd.xlane.f32.xlu0 %v722
        %v733 = vpop.xlane.xlu0 %732
        %734 = vadd.xlane.f32.xlu0 %v723
        %v735 = vpop.xlane.xlu0 %734
        %736 = vadd.xlane.f32.xlu0 %v724
        %v737 = vpop.xlane.xlu0 %736
        %738 = vadd.xlane.f32.xlu0 %v725
        %v739 = vpop.xlane.xlu0 %738
        %740 = vadd.xlane.f32.xlu0 %v726
        %v741 = vpop.xlane.xlu0 %740
        %742 = vadd.xlane.f32.xlu0 %v727
        %v743 = vpop.xlane.xlu0 %742
        %v744 = vmul.f32 %v720, %v507
        %v745 = vmul.f32 %v721, %v508
        %v746 = vmul.f32 %v722, %v509
        %v747 = vmul.f32 %v723, %v510
        %v748 = vmul.f32 %v724, %v511
        %v749 = vmul.f32 %v725, %v512
        %v750 = vmul.f32 %v726, %v513
        %v751 = vmul.f32 %v727, %v514
        %v752 = vmul.f32 %v598, 0.0
        %v753 = vmul.f32 %v613, %v729
        %v754 = vmul.f32 %v628, %v731
        %v755 = vmul.f32 %v643, %v733
        %v756 = vmul.f32 %v658, %v735
        %v757 = vmul.f32 %v673, %v737
        %v758 = vmul.f32 %v688, %v739
        %v759 = vmul.f32 %v703, %v741
        %v760 = vadd.f32 %v752, %v729
        %v761 = vadd.f32 %v753, %v731
        %v762 = vadd.f32 %v754, %v733
        %v763 = vadd.f32 %v755, %v735
        %v764 = vadd.f32 %v756, %v737
        %v765 = vadd.f32 %v757, %v739
        %v766 = vadd.f32 %v758, %v741
        %v767 = vadd.f32 %v759, %v743
        %v768 = vmul.f32 %v613, %v744
        %v769 = vmul.f32 %v628, %v745
        %v770 = vmul.f32 %v643, %v746
        %v771 = vmul.f32 %v658, %v747
        %v772 = vmul.f32 %v673, %v748
        %v773 = vmul.f32 %v688, %v749
        %v774 = vmul.f32 %v703, %v750
        %v775 = vadd.f32 %v752, %v744
        %v776 = vadd.f32 %v768, %v745
        %v777 = vadd.f32 %v769, %v746
        %v778 = vadd.f32 %v770, %v747
        %v779 = vadd.f32 %v771, %v748
        %v780 = vadd.f32 %v772, %v749
        %v781 = vadd.f32 %v773, %v750
        %v782 = vadd.f32 %v774, %v751
        %v783 = vmul.f32 %v613, %v598
        %v784 = vmul.f32 %v628, %v613
        %v785 = vmul.f32 %v643, %v628
        %v786 = vmul.f32 %v658, %v643
        %v787 = vmul.f32 %v673, %v658
        %v788 = vmul.f32 %v688, %v673
        %v789 = vmul.f32 %v703, %v688
        %v790 = vmul.f32 %v783, 0.0
        %v791 = vmul.f32 %v784, %v760
        %v792 = vmul.f32 %v785, %v761
        %v793 = vmul.f32 %v786, %v762
        %v794 = vmul.f32 %v787, %v763
        %v795 = vmul.f32 %v788, %v764
        %v796 = vmul.f32 %v789, %v765
        %v797 = vadd.f32 %v752, %v760
        %v798 = vadd.f32 %v790, %v761
        %v799 = vadd.f32 %v791, %v762
        %v800 = vadd.f32 %v792, %v763
        %v801 = vadd.f32 %v793, %v764
        %v802 = vadd.f32 %v794, %v765
        %v803 = vadd.f32 %v795, %v766
        %v804 = vadd.f32 %v796, %v767
        %806 = vset.pattern.permute.xlu0 0
        %807 = vperm.xlu0 %806, %v598
        %v808 = vpop.permute.xlu0 %807
        %811 = vset.pattern.permute.xlu0 0
        %812 = vperm.xlu0 %811, %v783
        %v813 = vpop.permute.xlu0 %812
        %816 = vset.pattern.permute.xlu0 0
        %817 = vperm.xlu0 %816, %v784
        %v818 = vpop.permute.xlu0 %817
        %821 = vset.pattern.permute.xlu0 0
        %822 = vperm.xlu0 %821, %v785
        %v823 = vpop.permute.xlu0 %822
        %826 = vset.pattern.permute.xlu0 0
        %827 = vperm.xlu0 %826, %v786
        %v828 = vpop.permute.xlu0 %827
        %831 = vset.pattern.permute.xlu0 0
        %832 = vperm.xlu0 %831, %v787
        %v833 = vpop.permute.xlu0 %832
        %836 = vset.pattern.permute.xlu0 0
        %837 = vperm.xlu0 %836, %v788
        %v838 = vpop.permute.xlu0 %837
        %841 = vset.pattern.permute.xlu0 0
        %842 = vperm.xlu0 %841, %v789
        %v843 = vpop.permute.xlu0 %842
        %v845 = vmul.f32 %v808, 0.0
        %v846 = vmul.f32 %v813, 0.0
        %v847 = vmul.f32 %v818, %v775
        %v848 = vmul.f32 %v823, %v776
        %v849 = vmul.f32 %v828, %v777
        %v850 = vmul.f32 %v833, %v778
        %v851 = vmul.f32 %v838, %v779
        %v852 = vmul.f32 %v843, %v780
        %v853 = vadd.f32 %v845, %v775
        %v854 = vadd.f32 %v846, %v776
        %v855 = vadd.f32 %v847, %v777
        %v856 = vadd.f32 %v848, %v778
        %v857 = vadd.f32 %v849, %v779
        %v858 = vadd.f32 %v850, %v780
        %v859 = vadd.f32 %v851, %v781
        %v860 = vadd.f32 %v852, %v782
        %v861 = vmul.f32 %v784, %v598
        %v862 = vmul.f32 %v785, %v783
        %v863 = vmul.f32 %v786, %v784
        %v864 = vmul.f32 %v787, %v785
        %v865 = vmul.f32 %v788, %v786
        %v866 = vmul.f32 %v789, %v787
        %v867 = vmul.f32 %v861, 0.0
        %v868 = vmul.f32 %v862, 0.0
        %v869 = vmul.f32 %v863, %v797
        %v870 = vmul.f32 %v864, %v798
        %v871 = vmul.f32 %v865, %v799
        %v872 = vmul.f32 %v866, %v800
        %v873 = vadd.f32 %v752, %v797
        %v874 = vadd.f32 %v790, %v798
        %v875 = vadd.f32 %v867, %v799
        %v876 = vadd.f32 %v868, %v800
        %v877 = vadd.f32 %v869, %v801
        %v878 = vadd.f32 %v870, %v802
        %v879 = vadd.f32 %v871, %v803
        %v880 = vadd.f32 %v872, %v804
        %882 = vset.pattern.permute.xlu0 0
        %883 = vperm.xlu0 %882, %v861
        %v884 = vpop.permute.xlu0 %883
        %887 = vset.pattern.permute.xlu0 0
        %888 = vperm.xlu0 %887, %v862
        %v889 = vpop.permute.xlu0 %888
        %892 = vset.pattern.permute.xlu0 0
        %893 = vperm.xlu0 %892, %v863
        %v894 = vpop.permute.xlu0 %893
        %897 = vset.pattern.permute.xlu0 0
        %898 = vperm.xlu0 %897, %v864
        %v899 = vpop.permute.xlu0 %898
        %902 = vset.pattern.permute.xlu0 0
        %903 = vperm.xlu0 %902, %v865
        %v904 = vpop.permute.xlu0 %903
        %907 = vset.pattern.permute.xlu0 0
        %908 = vperm.xlu0 %907, %v866
        %v909 = vpop.permute.xlu0 %908
        %v911 = vmul.f32 %v884, 0.0
        %v912 = vmul.f32 %v889, 0.0
        %v913 = vmul.f32 %v894, %v853
        %v914 = vmul.f32 %v899, %v854
        %v915 = vmul.f32 %v904, %v855
        %v916 = vmul.f32 %v909, %v856
        %v917 = vadd.f32 %v845, %v853
        %v918 = vadd.f32 %v846, %v854
        %v919 = vadd.f32 %v911, %v855
        %v920 = vadd.f32 %v912, %v856
        %v921 = vadd.f32 %v913, %v857
        %v922 = vadd.f32 %v914, %v858
        %v923 = vadd.f32 %v915, %v859
        %v924 = vadd.f32 %v916, %v860
        %v925 = vadd.f32 %v873, 1e-08
        %v926 = vadd.f32 %v874, 1e-08
        %v927 = vadd.f32 %v875, 1e-08
        %v928 = vadd.f32 %v876, 1e-08
        %v929 = vadd.f32 %v877, 1e-08
        %v930 = vadd.f32 %v878, 1e-08
        %v931 = vadd.f32 %v879, 1e-08
        %v932 = vadd.f32 %v880, 1e-08
        %v933 = vrcp.pop %v925
        %v934 = vrcp.pop %v926
        %v935 = vrcp.pop %v927
        %v936 = vrcp.pop %v928
        %v937 = vrcp.pop %v929
        %v938 = vrcp.pop %v930
        %v939 = vrcp.pop %v931
        %v940 = vrcp.pop %v932
        %v941 = vmul.f32 %v925, %v933
        %v942 = vmul.f32 %v926, %v934
        %v943 = vmul.f32 %v927, %v935
        %v944 = vmul.f32 %v928, %v936
        %v945 = vmul.f32 %v929, %v937
        %v946 = vmul.f32 %v930, %v938
        %v947 = vmul.f32 %v931, %v939
        %v948 = vmul.f32 %v932, %v940
        %v949 = vsub.f32 2.0, %v941
        %v950 = vsub.f32 2.0, %v942
        %v951 = vsub.f32 2.0, %v943
        %v952 = vsub.f32 2.0, %v944
        %v953 = vsub.f32 2.0, %v945
        %v954 = vsub.f32 2.0, %v946
        %v955 = vsub.f32 2.0, %v947
        %v956 = vsub.f32 2.0, %v948
        %v957 = vmul.f32 %v933, %v949
        %v958 = vmul.f32 %v934, %v950
        %v959 = vmul.f32 %v935, %v951
        %v960 = vmul.f32 %v936, %v952
        %v961 = vmul.f32 %v937, %v953
        %v962 = vmul.f32 %v938, %v954
        %v963 = vmul.f32 %v939, %v955
        %v964 = vmul.f32 %v940, %v956
        %966 = vset.pattern.permute.xlu0 0
        %967 = vperm.xlu0 %966, %v957
        %v968 = vpop.permute.xlu0 %967
        %971 = vset.pattern.permute.xlu0 0
        %972 = vperm.xlu0 %971, %v958
        %v973 = vpop.permute.xlu0 %972
        %976 = vset.pattern.permute.xlu0 0
        %977 = vperm.xlu0 %976, %v959
        %v978 = vpop.permute.xlu0 %977
        %981 = vset.pattern.permute.xlu0 0
        %982 = vperm.xlu0 %981, %v960
        %v983 = vpop.permute.xlu0 %982
        %986 = vset.pattern.permute.xlu0 0
        %987 = vperm.xlu0 %986, %v961
        %v988 = vpop.permute.xlu0 %987
        %991 = vset.pattern.permute.xlu0 0
        %992 = vperm.xlu0 %991, %v962
        %v993 = vpop.permute.xlu0 %992
        %996 = vset.pattern.permute.xlu0 0
        %997 = vperm.xlu0 %996, %v963
        %v998 = vpop.permute.xlu0 %997
        %1001 = vset.pattern.permute.xlu0 0
        %1002 = vperm.xlu0 %1001, %v964
        %v1003 = vpop.permute.xlu0 %1002
        %v1005 = vmul.f32 %v917, %v968
        %v1006 = vmul.f32 %v918, %v973
        %v1007 = vmul.f32 %v919, %v978
        %v1008 = vmul.f32 %v920, %v983
        %v1009 = vmul.f32 %v921, %v988
        %v1010 = vmul.f32 %v922, %v993
        %v1011 = vmul.f32 %v923, %v998
        %v1012 = vmul.f32 %v924, %v1003
        %v1013 = vld [vmem:[%s5] sm:$0x1]
        %v1014 = vld [vmem:[%s6] sm:$0x1]
        %1015 = vadd.xlane.f32.xlu0 %v1005
        %v1016 = vpop.xlane.xlu0 %1015
        %1017 = vadd.xlane.f32.xlu0 %v1006
        %v1018 = vpop.xlane.xlu0 %1017
        %1019 = vadd.xlane.f32.xlu0 %v1007
        %v1020 = vpop.xlane.xlu0 %1019
        %1021 = vadd.xlane.f32.xlu0 %v1008
        %v1022 = vpop.xlane.xlu0 %1021
        %1023 = vadd.xlane.f32.xlu0 %v1009
        %v1024 = vpop.xlane.xlu0 %1023
        %1025 = vadd.xlane.f32.xlu0 %v1010
        %v1026 = vpop.xlane.xlu0 %1025
        %1027 = vadd.xlane.f32.xlu0 %v1011
        %v1028 = vpop.xlane.xlu0 %1027
        %1029 = vadd.xlane.f32.xlu0 %v1012
        %v1030 = vpop.xlane.xlu0 %1029
        %v1031 = vmul.f32 %v1016, 0.02
        %v1032 = vmul.f32 %v1018, 0.02
        %v1033 = vmul.f32 %v1020, 0.02
        %v1034 = vmul.f32 %v1022, 0.02
        %v1035 = vmul.f32 %v1024, 0.02
        %v1036 = vmul.f32 %v1026, 0.02
        %v1037 = vmul.f32 %v1028, 0.02
        %v1038 = vmul.f32 %v1030, 0.02
        %v1039 = vsub.f32 %v1005, %v1031
        %v1040 = vsub.f32 %v1006, %v1032
        %v1041 = vsub.f32 %v1007, %v1033
        %v1042 = vsub.f32 %v1008, %v1034
        %v1043 = vsub.f32 %v1009, %v1035
        %v1044 = vsub.f32 %v1010, %v1036
        %v1045 = vsub.f32 %v1011, %v1037
        %v1046 = vsub.f32 %v1012, %v1038
        %v1047 = vmul.f32 %v1039, %v487
        %v1048 = vmul.f32 %v1040, %v487
        %v1049 = vmul.f32 %v1041, %v487
        %v1050 = vmul.f32 %v1042, %v487
        %v1051 = vmul.f32 %v1043, %v487
        %v1052 = vmul.f32 %v1044, %v487
        %v1053 = vmul.f32 %v1045, %v487
        %v1054 = vmul.f32 %v1046, %v487
        %v1055 = vmul.f32 %v1047, %v1047
        %v1056 = vmul.f32 %v1048, %v1048
        %v1057 = vmul.f32 %v1049, %v1049
        %v1058 = vmul.f32 %v1050, %v1050
        %v1059 = vmul.f32 %v1051, %v1051
        %v1060 = vmul.f32 %v1052, %v1052
        %v1061 = vmul.f32 %v1053, %v1053
        %v1062 = vmul.f32 %v1054, %v1054
        %1063 = vadd.xlane.f32.xlu0 %v1055
        %v1064 = vpop.xlane.xlu0 %1063
        %1065 = vadd.xlane.f32.xlu0 %v1056
        %v1066 = vpop.xlane.xlu0 %1065
        %1067 = vadd.xlane.f32.xlu0 %v1057
        %v1068 = vpop.xlane.xlu0 %1067
        %1069 = vadd.xlane.f32.xlu0 %v1058
        %v1070 = vpop.xlane.xlu0 %1069
        %1071 = vadd.xlane.f32.xlu0 %v1059
        %v1072 = vpop.xlane.xlu0 %1071
        %1073 = vadd.xlane.f32.xlu0 %v1060
        %v1074 = vpop.xlane.xlu0 %1073
        %1075 = vadd.xlane.f32.xlu0 %v1061
        %v1076 = vpop.xlane.xlu0 %1075
        %1077 = vadd.xlane.f32.xlu0 %v1062
        %v1078 = vpop.xlane.xlu0 %1077
        %v1079 = vmul.f32 %v1064, 0.02
        %v1080 = vmul.f32 %v1066, 0.02
        %v1081 = vmul.f32 %v1068, 0.02
        %v1082 = vmul.f32 %v1070, 0.02
        %v1083 = vmul.f32 %v1072, 0.02
        %v1084 = vmul.f32 %v1074, 0.02
        %v1085 = vmul.f32 %v1076, 0.02
        %v1086 = vmul.f32 %v1078, 0.02
        %v1087 = vadd.f32 %v1079, 1e-05
        %v1088 = vadd.f32 %v1080, 1e-05
        %v1089 = vadd.f32 %v1081, 1e-05
        %v1090 = vadd.f32 %v1082, 1e-05
        %v1091 = vadd.f32 %v1083, 1e-05
        %v1092 = vadd.f32 %v1084, 1e-05
        %v1093 = vadd.f32 %v1085, 1e-05
        %v1094 = vadd.f32 %v1086, 1e-05
        %v1095 = vrsqrt.pop %v1087
        %v1096 = vmul.f32 %v1095, %v1087
        %v1097 = vmul.f32 %v1096, %v1095
        %v1098 = vmul.f32 0.5, %v1097
        %v1099 = vsub.f32 1.5, %v1098
        %v1100 = vmul.f32 %v1095, %v1099
        %vm1101 = vweird.f32 %v1087
        %vm1102 = vweird.f32 %v1095
        %vm1103 = vmor %vm1101, %vm1102
        %v1104 = vsel %vm1103, %v1095, %v1100
        %v1105 = vrsqrt.pop %v1088
        %v1106 = vmul.f32 %v1105, %v1088
        %v1107 = vmul.f32 %v1106, %v1105
        %v1108 = vmul.f32 0.5, %v1107
        %v1109 = vsub.f32 1.5, %v1108
        %v1110 = vmul.f32 %v1105, %v1109
        %vm1111 = vweird.f32 %v1088
        %vm1112 = vweird.f32 %v1105
        %vm1113 = vmor %vm1111, %vm1112
        %v1114 = vsel %vm1113, %v1105, %v1110
        %v1115 = vrsqrt.pop %v1089
        %v1116 = vmul.f32 %v1115, %v1089
        %v1117 = vmul.f32 %v1116, %v1115
        %v1118 = vmul.f32 0.5, %v1117
        %v1119 = vsub.f32 1.5, %v1118
        %v1120 = vmul.f32 %v1115, %v1119
        %vm1121 = vweird.f32 %v1089
        %vm1122 = vweird.f32 %v1115
        %vm1123 = vmor %vm1121, %vm1122
        %v1124 = vsel %vm1123, %v1115, %v1120
        %v1125 = vrsqrt.pop %v1090
        %v1126 = vmul.f32 %v1125, %v1090
        %v1127 = vmul.f32 %v1126, %v1125
        %v1128 = vmul.f32 0.5, %v1127
        %v1129 = vsub.f32 1.5, %v1128
        %v1130 = vmul.f32 %v1125, %v1129
        %vm1131 = vweird.f32 %v1090
        %vm1132 = vweird.f32 %v1125
        %vm1133 = vmor %vm1131, %vm1132
        %v1134 = vsel %vm1133, %v1125, %v1130
        %v1135 = vrsqrt.pop %v1091
        %v1136 = vmul.f32 %v1135, %v1091
        %v1137 = vmul.f32 %v1136, %v1135
        %v1138 = vmul.f32 0.5, %v1137
        %v1139 = vsub.f32 1.5, %v1138
        %v1140 = vmul.f32 %v1135, %v1139
        %vm1141 = vweird.f32 %v1091
        %vm1142 = vweird.f32 %v1135
        %vm1143 = vmor %vm1141, %vm1142
        %v1144 = vsel %vm1143, %v1135, %v1140
        %v1145 = vrsqrt.pop %v1092
        %v1146 = vmul.f32 %v1145, %v1092
        %v1147 = vmul.f32 %v1146, %v1145
        %v1148 = vmul.f32 0.5, %v1147
        %v1149 = vsub.f32 1.5, %v1148
        %v1150 = vmul.f32 %v1145, %v1149
        %vm1151 = vweird.f32 %v1092
        %vm1152 = vweird.f32 %v1145
        %vm1153 = vmor %vm1151, %vm1152
        %v1154 = vsel %vm1153, %v1145, %v1150
        %v1155 = vrsqrt.pop %v1093
        %v1156 = vmul.f32 %v1155, %v1093
        %v1157 = vmul.f32 %v1156, %v1155
        %v1158 = vmul.f32 0.5, %v1157
        %v1159 = vsub.f32 1.5, %v1158
        %v1160 = vmul.f32 %v1155, %v1159
        %vm1161 = vweird.f32 %v1093
        %vm1162 = vweird.f32 %v1155
        %vm1163 = vmor %vm1161, %vm1162
        %v1164 = vsel %vm1163, %v1155, %v1160
        %v1165 = vrsqrt.pop %v1094
        %v1166 = vmul.f32 %v1165, %v1094
        %v1167 = vmul.f32 %v1166, %v1165
        %v1168 = vmul.f32 0.5, %v1167
        %v1169 = vsub.f32 1.5, %v1168
        %v1170 = vmul.f32 %v1165, %v1169
        %vm1171 = vweird.f32 %v1094
        %vm1172 = vweird.f32 %v1165
        %vm1173 = vmor %vm1171, %vm1172
        %v1174 = vsel %vm1173, %v1165, %v1170
        %v1175 = vmul.f32 %v1047, %v1104
        %v1176 = vmul.f32 %v1048, %v1114
        %v1177 = vmul.f32 %v1049, %v1124
        %v1178 = vmul.f32 %v1050, %v1134
        %v1179 = vmul.f32 %v1051, %v1144
        %v1180 = vmul.f32 %v1052, %v1154
        %v1181 = vmul.f32 %v1053, %v1164
        %v1182 = vmul.f32 %v1054, %v1174
        %v1184 = vperm.slane %v1013, 0
        %v1186 = vmul.f32 %v1175, %v1184
        %v1187 = vmul.f32 %v1176, %v1184
        %v1188 = vmul.f32 %v1177, %v1184
        %v1189 = vmul.f32 %v1178, %v1184
        %v1190 = vmul.f32 %v1179, %v1184
        %v1191 = vmul.f32 %v1180, %v1184
        %v1192 = vmul.f32 %v1181, %v1184
        %v1193 = vmul.f32 %v1182, %v1184
        %v1195 = vperm.slane %v1014, 0
        %v1197 = vadd.f32 %v1186, %v1195
        %v1198 = vadd.f32 %v1187, %v1195
        %v1199 = vadd.f32 %v1188, %v1195
        %v1200 = vadd.f32 %v1189, %v1195
        %v1201 = vadd.f32 %v1190, %v1195
        %v1202 = vadd.f32 %v1191, %v1195
        %v1203 = vadd.f32 %v1192, %v1195
        %v1204 = vadd.f32 %v1193, %v1195
        %v1205 = vpack.c.bf16 %v1198, %v1197
        %v1206 = vpack.c.bf16 %v1200, %v1199
        %v1207 = vpack.c.bf16 %v1202, %v1201
        %v1208 = vpack.c.bf16 %v1204, %v1203
        %v1209 = vld [vmem:[#allocation9] sm:$0xff]
        %v1210 = vld [vmem:[#allocation9 + $0x8] sm:$0xff]
        %v1211 = vld [vmem:[#allocation9 + $0x10] sm:$0xff]
        %v1212 = vld [vmem:[#allocation9 + $0x18] sm:$0xff]
        %v1213 = vld [vmem:[#allocation9 + $0x20] sm:$0xff]
        %v1214 = vld [vmem:[#allocation9 + $0x28] sm:$0xff]
        %v1215 = vld [vmem:[#allocation9 + $0x30] sm:$0xff]
        %v1216 = vld [vmem:[#allocation9 + $0x38] sm:$0xff]
        %v1217 = vld [vmem:[#allocation9 + $0x40] sm:$0xff]
        %v1218 = vld [vmem:[#allocation9 + $0x48] sm:$0xff]
        %v1219 = vld [vmem:[#allocation9 + $0x50] sm:$0xff]
        %v1220 = vld [vmem:[#allocation9 + $0x58] sm:$0xff]
        %v1221 = vld [vmem:[#allocation9 + $0x60] sm:$0xff]
        %v1222 = vld [vmem:[#allocation9 + $0x68] sm:$0xff]
        %v1223 = vld [vmem:[#allocation9 + $0x70] sm:$0xff]
        %v1224 = vld [vmem:[#allocation9 + $0x78] sm:$0xff]
        %v1225 = vld [vmem:[%s8] sm:$0x3]
        %v1227 = vperm.slane %v1225, 0
        %v1228 = vperm.slane %v1225, 1
        %v1247 = vunpack.c.l.b16 %v1209
        %v1248 = vunpack.c.h.b16 %v1209
        %v1249 = vunpack.c.l.b16 %v1210
        %v1250 = vunpack.c.h.b16 %v1210
        %v1251 = vunpack.c.l.b16 %v1211
        %v1252 = vunpack.c.h.b16 %v1211
        %v1253 = vunpack.c.l.b16 %v1212
        %v1254 = vunpack.c.h.b16 %v1212
        %v1255 = vunpack.c.l.b16 %v1213
        %v1256 = vunpack.c.h.b16 %v1213
        %v1257 = vunpack.c.l.b16 %v1214
        %v1258 = vunpack.c.h.b16 %v1214
        %v1259 = vunpack.c.l.b16 %v1215
        %v1260 = vunpack.c.h.b16 %v1215
        %v1261 = vunpack.c.l.b16 %v1216
        %v1262 = vunpack.c.h.b16 %v1216
        %v1263 = vunpack.c.l.b16 %v1217
        %v1264 = vunpack.c.h.b16 %v1217
        %v1265 = vunpack.c.l.b16 %v1218
        %v1266 = vunpack.c.h.b16 %v1218
        %v1267 = vunpack.c.l.b16 %v1219
        %v1268 = vunpack.c.h.b16 %v1219
        %v1269 = vunpack.c.l.b16 %v1220
        %v1270 = vunpack.c.h.b16 %v1220
        %v1271 = vunpack.c.l.b16 %v1221
        %v1272 = vunpack.c.h.b16 %v1221
        %v1273 = vunpack.c.l.b16 %v1222
        %v1274 = vunpack.c.h.b16 %v1222
        %v1275 = vunpack.c.l.b16 %v1223
        %v1276 = vunpack.c.h.b16 %v1223
        %v1277 = vunpack.c.l.b16 %v1224
        %v1278 = vunpack.c.h.b16 %v1224
        %v1279 = vpack.c.b16 %v1249, %v1247
        %v1280 = vpack.c.b16 %v1250, %v1248
        %v1281 = vpack.c.b16 %v1253, %v1251
        %v1282 = vpack.c.b16 %v1254, %v1252
        %v1283 = vpack.c.b16 %v1257, %v1255
        %v1284 = vpack.c.b16 %v1258, %v1256
        %v1285 = vpack.c.b16 %v1261, %v1259
        %v1286 = vpack.c.b16 %v1262, %v1260
        %v1287 = vpack.c.b16 %v1265, %v1263
        %v1288 = vpack.c.b16 %v1266, %v1264
        %v1289 = vpack.c.b16 %v1269, %v1267
        %v1290 = vpack.c.b16 %v1270, %v1268
        %v1291 = vpack.c.b16 %v1273, %v1271
        %v1292 = vpack.c.b16 %v1274, %v1272
        %v1293 = vpack.c.b16 %v1277, %v1275
        %v1294 = vpack.c.b16 %v1278, %v1276
        %1311 = vmatpush.bf16.msra.mxu0 %v1293
        %1312 = vmatpush.bf16.msra.mxu0 %v1291
        %1313 = vmatpush.bf16.msra.mxu0 %v1289
        %1314 = vmatpush.bf16.msra.mxu0 %v1287
        %1315 = vmatpush.bf16.msra.mxu0 %v1285
        %1316 = vmatpush.bf16.msra.mxu0 %v1283
        %1317 = vmatpush.bf16.msra.mxu0 %v1281
        %1318 = vmatpush.bf16.msra.mxu0 %v1279
        %1319 = vmatmul.bf16.gmra.mxu0 %v1205
        %v1320 = vpop.f32.mrf.mxu0
        %v1321 = vadd.f32 %v1227, %v1320
        %v1322 = vpop.f32.mrf.mxu0
        %v1323 = vadd.f32 %v1227, %v1322
        %1324 = vmatmul.bf16.gmra.mxu0 %v1206
        %v1325 = vpop.f32.mrf.mxu0
        %v1326 = vadd.f32 %v1227, %v1325
        %v1327 = vpop.f32.mrf.mxu0
        %v1328 = vadd.f32 %v1227, %v1327
        %1329 = vmatmul.bf16.gmra.mxu0 %v1207
        %v1330 = vpop.f32.mrf.mxu0
        %v1331 = vadd.f32 %v1227, %v1330
        %v1332 = vpop.f32.mrf.mxu0
        %v1333 = vadd.f32 %v1227, %v1332
        %1334 = vmatmul.bf16.gmra.mxu0 %v1208
        %v1335 = vpop.f32.mrf.mxu0
        %v1336 = vadd.f32 %v1227, %v1335
        %v1337 = vpop.f32.mrf.mxu0
        %v1338 = vadd.f32 %v1227, %v1337
        %1339 = vdwg.mxu0
        %1340 = vmatpush.bf16.msra.mxu0 %v1294
        %1341 = vmatpush.bf16.msra.mxu0 %v1292
        %1342 = vmatpush.bf16.msra.mxu0 %v1290
        %1343 = vmatpush.bf16.msra.mxu0 %v1288
        %1344 = vmatpush.bf16.msra.mxu0 %v1286
        %1345 = vmatpush.bf16.msra.mxu0 %v1284
        %1346 = vmatpush.bf16.msra.mxu0 %v1282
        %1347 = vmatpush.bf16.msra.mxu0 %v1280
        %1348 = vmatmul.bf16.gmra.mxu0 %v1205
        %v1349 = vpop.f32.mrf.mxu0
        %v1350 = vadd.f32 %v1228, %v1349
        %v1351 = vpop.f32.mrf.mxu0
        %v1352 = vadd.f32 %v1228, %v1351
        %1353 = vmatmul.bf16.gmra.mxu0 %v1206
        %v1354 = vpop.f32.mrf.mxu0
        %v1355 = vadd.f32 %v1228, %v1354
        %v1356 = vpop.f32.mrf.mxu0
        %v1357 = vadd.f32 %v1228, %v1356
        %1358 = vmatmul.bf16.gmra.mxu0 %v1207
        %v1359 = vpop.f32.mrf.mxu0
        %v1360 = vadd.f32 %v1228, %v1359
        %v1361 = vpop.f32.mrf.mxu0
        %v1362 = vadd.f32 %v1228, %v1361
        %1363 = vmatmul.bf16.gmra.mxu0 %v1208
        %v1364 = vpop.f32.mrf.mxu0
        %v1365 = vadd.f32 %v1228, %v1364
        %v1366 = vpop.f32.mrf.mxu0
        %v1367 = vadd.f32 %v1228, %v1366
        %1368 = vdwg.mxu0
        %v1369 = vxor.u32 %v1321, 2147483648
        %v1370 = vxor.u32 %v1323, 2147483648
        %v1371 = vxor.u32 %v1326, 2147483648
        %v1372 = vxor.u32 %v1328, 2147483648
        %v1373 = vxor.u32 %v1331, 2147483648
        %v1374 = vxor.u32 %v1333, 2147483648
        %v1375 = vxor.u32 %v1336, 2147483648
        %v1376 = vxor.u32 %v1338, 2147483648
        %v1377 = vmul.f32 %v1369, 1.442695
        %v1378 = vpow.pop %v1377
        %v1379 = vmul.f32 %v1370, 1.442695
        %v1380 = vpow.pop %v1379
        %v1381 = vmul.f32 %v1371, 1.442695
        %v1382 = vpow.pop %v1381
        %v1383 = vmul.f32 %v1372, 1.442695
        %v1384 = vpow.pop %v1383
        %v1385 = vmul.f32 %v1373, 1.442695
        %v1386 = vpow.pop %v1385
        %v1387 = vmul.f32 %v1374, 1.442695
        %v1388 = vpow.pop %v1387
        %v1389 = vmul.f32 %v1375, 1.442695
        %v1390 = vpow.pop %v1389
        %v1391 = vmul.f32 %v1376, 1.442695
        %v1392 = vpow.pop %v1391
        %v1393 = vadd.f32 %v1378, 1.0
        %v1394 = vadd.f32 %v1380, 1.0
        %v1395 = vadd.f32 %v1382, 1.0
        %v1396 = vadd.f32 %v1384, 1.0
        %v1397 = vadd.f32 %v1386, 1.0
        %v1398 = vadd.f32 %v1388, 1.0
        %v1399 = vadd.f32 %v1390, 1.0
        %v1400 = vadd.f32 %v1392, 1.0
        %v1401 = vrcp.pop %v1393
        %v1402 = vmul.f32 %v1393, %v1401
        %v1403 = vsub.f32 1.0, %v1402
        %v1404 = vmul.f32 %v1401, %v1403
        %v1405 = vadd.f32 %v1401, %v1404
        %vm1406 = vweird.f32 %v1393
        %vm1407 = vweird.f32 %v1401
        %vm1408 = vmor %vm1406, %vm1407
        %v1409 = vsel %vm1408, %v1401, %v1405
        %v1410 = vand.u32 2147483647, %v1393
        %vm1411 = vcmp.eq.f32.partialorder %v1410, 8.507059e+37
        %v1412 = vand.u32 %v1393, 2147483648
        %v1413 = vor.u32 1.1754944e-38, %v1412
        %v1414 = vsel %vm1411, %v1413, %v1409
        %v1415 = vmul.f32 1.0, %v1414
        %v1416 = vrcp.pop %v1394
        %v1417 = vmul.f32 %v1394, %v1416
        %v1418 = vsub.f32 1.0, %v1417
        %v1419 = vmul.f32 %v1416, %v1418
        %v1420 = vadd.f32 %v1416, %v1419
        %vm1421 = vweird.f32 %v1394
        %vm1422 = vweird.f32 %v1416
        %vm1423 = vmor %vm1421, %vm1422
        %v1424 = vsel %vm1423, %v1416, %v1420
        %v1425 = vand.u32 2147483647, %v1394
        %vm1426 = vcmp.eq.f32.partialorder %v1425, 8.507059e+37
        %v1427 = vand.u32 %v1394, 2147483648
        %v1428 = vor.u32 1.1754944e-38, %v1427
        %v1429 = vsel %vm1426, %v1428, %v1424
        %v1430 = vmul.f32 1.0, %v1429
        %v1431 = vrcp.pop %v1395
        %v1432 = vmul.f32 %v1395, %v1431
        %v1433 = vsub.f32 1.0, %v1432
        %v1434 = vmul.f32 %v1431, %v1433
        %v1435 = vadd.f32 %v1431, %v1434
        %vm1436 = vweird.f32 %v1395
        %vm1437 = vweird.f32 %v1431
        %vm1438 = vmor %vm1436, %vm1437
        %v1439 = vsel %vm1438, %v1431, %v1435
        %v1440 = vand.u32 2147483647, %v1395
        %vm1441 = vcmp.eq.f32.partialorder %v1440, 8.507059e+37
        %v1442 = vand.u32 %v1395, 2147483648
        %v1443 = vor.u32 1.1754944e-38, %v1442
        %v1444 = vsel %vm1441, %v1443, %v1439
        %v1445 = vmul.f32 1.0, %v1444
        %v1446 = vrcp.pop %v1396
        %v1447 = vmul.f32 %v1396, %v1446
        %v1448 = vsub.f32 1.0, %v1447
        %v1449 = vmul.f32 %v1446, %v1448
        %v1450 = vadd.f32 %v1446, %v1449
        %vm1451 = vweird.f32 %v1396
        %vm1452 = vweird.f32 %v1446
        %vm1453 = vmor %vm1451, %vm1452
        %v1454 = vsel %vm1453, %v1446, %v1450
        %v1455 = vand.u32 2147483647, %v1396
        %vm1456 = vcmp.eq.f32.partialorder %v1455, 8.507059e+37
        %v1457 = vand.u32 %v1396, 2147483648
        %v1458 = vor.u32 1.1754944e-38, %v1457
        %v1459 = vsel %vm1456, %v1458, %v1454
        %v1460 = vmul.f32 1.0, %v1459
        %v1461 = vrcp.pop %v1397
        %v1462 = vmul.f32 %v1397, %v1461
        %v1463 = vsub.f32 1.0, %v1462
        %v1464 = vmul.f32 %v1461, %v1463
        %v1465 = vadd.f32 %v1461, %v1464
        %vm1466 = vweird.f32 %v1397
        %vm1467 = vweird.f32 %v1461
        %vm1468 = vmor %vm1466, %vm1467
        %v1469 = vsel %vm1468, %v1461, %v1465
        %v1470 = vand.u32 2147483647, %v1397
        %vm1471 = vcmp.eq.f32.partialorder %v1470, 8.507059e+37
        %v1472 = vand.u32 %v1397, 2147483648
        %v1473 = vor.u32 1.1754944e-38, %v1472
        %v1474 = vsel %vm1471, %v1473, %v1469
        %v1475 = vmul.f32 1.0, %v1474
        %v1476 = vrcp.pop %v1398
        %v1477 = vmul.f32 %v1398, %v1476
        %v1478 = vsub.f32 1.0, %v1477
        %v1479 = vmul.f32 %v1476, %v1478
        %v1480 = vadd.f32 %v1476, %v1479
        %vm1481 = vweird.f32 %v1398
        %vm1482 = vweird.f32 %v1476
        %vm1483 = vmor %vm1481, %vm1482
        %v1484 = vsel %vm1483, %v1476, %v1480
        %v1485 = vand.u32 2147483647, %v1398
        %vm1486 = vcmp.eq.f32.partialorder %v1485, 8.507059e+37
        %v1487 = vand.u32 %v1398, 2147483648
        %v1488 = vor.u32 1.1754944e-38, %v1487
        %v1489 = vsel %vm1486, %v1488, %v1484
        %v1490 = vmul.f32 1.0, %v1489
        %v1491 = vrcp.pop %v1399
        %v1492 = vmul.f32 %v1399, %v1491
        %v1493 = vsub.f32 1.0, %v1492
        %v1494 = vmul.f32 %v1491, %v1493
        %v1495 = vadd.f32 %v1491, %v1494
        %vm1496 = vweird.f32 %v1399
        %vm1497 = vweird.f32 %v1491
        %vm1498 = vmor %vm1496, %vm1497
        %v1499 = vsel %vm1498, %v1491, %v1495
        %v1500 = vand.u32 2147483647, %v1399
        %vm1501 = vcmp.eq.f32.partialorder %v1500, 8.507059e+37
        %v1502 = vand.u32 %v1399, 2147483648
        %v1503 = vor.u32 1.1754944e-38, %v1502
        %v1504 = vsel %vm1501, %v1503, %v1499
        %v1505 = vmul.f32 1.0, %v1504
        %v1506 = vrcp.pop %v1400
        %v1507 = vmul.f32 %v1400, %v1506
        %v1508 = vsub.f32 1.0, %v1507
        %v1509 = vmul.f32 %v1506, %v1508
        %v1510 = vadd.f32 %v1506, %v1509
        %vm1511 = vweird.f32 %v1400
        %vm1512 = vweird.f32 %v1506
        %vm1513 = vmor %vm1511, %vm1512
        %v1514 = vsel %vm1513, %v1506, %v1510
        %v1515 = vand.u32 2147483647, %v1400
        %vm1516 = vcmp.eq.f32.partialorder %v1515, 8.507059e+37
        %v1517 = vand.u32 %v1400, 2147483648
        %v1518 = vor.u32 1.1754944e-38, %v1517
        %v1519 = vsel %vm1516, %v1518, %v1514
        %v1520 = vmul.f32 1.0, %v1519
        %v1521 = vmul.f32 %v1415, %v1350
        %v1522 = vmul.f32 %v1430, %v1352
        %v1523 = vmul.f32 %v1445, %v1355
        %v1524 = vmul.f32 %v1460, %v1357
        %v1525 = vmul.f32 %v1475, %v1360
        %v1526 = vmul.f32 %v1490, %v1362
        %v1527 = vmul.f32 %v1505, %v1365
        %v1528 = vmul.f32 %v1520, %v1367
        %v1529 = vld [vmem:[%s9] sm:$0x1]
        %v1530 = vld [vmem:[%s10] sm:$0x1]
        %1531 = vadd.xlane.f32.xlu0 %v1521
        %v1532 = vpop.xlane.xlu0 %1531
        %1533 = vadd.xlane.f32.xlu0 %v1522
        %v1534 = vpop.xlane.xlu0 %1533
        %1535 = vadd.xlane.f32.xlu0 %v1523
        %v1536 = vpop.xlane.xlu0 %1535
        %1537 = vadd.xlane.f32.xlu0 %v1524
        %v1538 = vpop.xlane.xlu0 %1537
        %1539 = vadd.xlane.f32.xlu0 %v1525
        %v1540 = vpop.xlane.xlu0 %1539
        %1541 = vadd.xlane.f32.xlu0 %v1526
        %v1542 = vpop.xlane.xlu0 %1541
        %1543 = vadd.xlane.f32.xlu0 %v1527
        %v1544 = vpop.xlane.xlu0 %1543
        %1545 = vadd.xlane.f32.xlu0 %v1528
        %v1546 = vpop.xlane.xlu0 %1545
        %v1547 = vmul.f32 %v1532, 0.02
        %v1548 = vmul.f32 %v1534, 0.02
        %v1549 = vmul.f32 %v1536, 0.02
        %v1550 = vmul.f32 %v1538, 0.02
        %v1551 = vmul.f32 %v1540, 0.02
        %v1552 = vmul.f32 %v1542, 0.02
        %v1553 = vmul.f32 %v1544, 0.02
        %v1554 = vmul.f32 %v1546, 0.02
        %v1555 = vsub.f32 %v1521, %v1547
        %v1556 = vsub.f32 %v1522, %v1548
        %v1557 = vsub.f32 %v1523, %v1549
        %v1558 = vsub.f32 %v1524, %v1550
        %v1559 = vsub.f32 %v1525, %v1551
        %v1560 = vsub.f32 %v1526, %v1552
        %v1561 = vsub.f32 %v1527, %v1553
        %v1562 = vsub.f32 %v1528, %v1554
        %v1563 = vmul.f32 %v1555, %v487
        %v1564 = vmul.f32 %v1556, %v487
        %v1565 = vmul.f32 %v1557, %v487
        %v1566 = vmul.f32 %v1558, %v487
        %v1567 = vmul.f32 %v1559, %v487
        %v1568 = vmul.f32 %v1560, %v487
        %v1569 = vmul.f32 %v1561, %v487
        %v1570 = vmul.f32 %v1562, %v487
        %v1571 = vmul.f32 %v1563, %v1563
        %v1572 = vmul.f32 %v1564, %v1564
        %v1573 = vmul.f32 %v1565, %v1565
        %v1574 = vmul.f32 %v1566, %v1566
        %v1575 = vmul.f32 %v1567, %v1567
        %v1576 = vmul.f32 %v1568, %v1568
        %v1577 = vmul.f32 %v1569, %v1569
        %v1578 = vmul.f32 %v1570, %v1570
        %1579 = vadd.xlane.f32.xlu0 %v1571
        %v1580 = vpop.xlane.xlu0 %1579
        %1581 = vadd.xlane.f32.xlu0 %v1572
        %v1582 = vpop.xlane.xlu0 %1581
        %1583 = vadd.xlane.f32.xlu0 %v1573
        %v1584 = vpop.xlane.xlu0 %1583
        %1585 = vadd.xlane.f32.xlu0 %v1574
        %v1586 = vpop.xlane.xlu0 %1585
        %1587 = vadd.xlane.f32.xlu0 %v1575
        %v1588 = vpop.xlane.xlu0 %1587
        %1589 = vadd.xlane.f32.xlu0 %v1576
        %v1590 = vpop.xlane.xlu0 %1589
        %1591 = vadd.xlane.f32.xlu0 %v1577
        %v1592 = vpop.xlane.xlu0 %1591
        %1593 = vadd.xlane.f32.xlu0 %v1578
        %v1594 = vpop.xlane.xlu0 %1593
        %v1595 = vmul.f32 %v1580, 0.02
        %v1596 = vmul.f32 %v1582, 0.02
        %v1597 = vmul.f32 %v1584, 0.02
        %v1598 = vmul.f32 %v1586, 0.02
        %v1599 = vmul.f32 %v1588, 0.02
        %v1600 = vmul.f32 %v1590, 0.02
        %v1601 = vmul.f32 %v1592, 0.02
        %v1602 = vmul.f32 %v1594, 0.02
        %v1603 = vadd.f32 %v1595, 1e-05
        %v1604 = vadd.f32 %v1596, 1e-05
        %v1605 = vadd.f32 %v1597, 1e-05
        %v1606 = vadd.f32 %v1598, 1e-05
        %v1607 = vadd.f32 %v1599, 1e-05
        %v1608 = vadd.f32 %v1600, 1e-05
        %v1609 = vadd.f32 %v1601, 1e-05
        %v1610 = vadd.f32 %v1602, 1e-05
        %v1611 = vrsqrt.pop %v1603
        %v1612 = vmul.f32 %v1611, %v1603
        %v1613 = vmul.f32 %v1612, %v1611
        %v1614 = vmul.f32 0.5, %v1613
        %v1615 = vsub.f32 1.5, %v1614
        %v1616 = vmul.f32 %v1611, %v1615
        %vm1617 = vweird.f32 %v1603
        %vm1618 = vweird.f32 %v1611
        %vm1619 = vmor %vm1617, %vm1618
        %v1620 = vsel %vm1619, %v1611, %v1616
        %v1621 = vrsqrt.pop %v1604
        %v1622 = vmul.f32 %v1621, %v1604
        %v1623 = vmul.f32 %v1622, %v1621
        %v1624 = vmul.f32 0.5, %v1623
        %v1625 = vsub.f32 1.5, %v1624
        %v1626 = vmul.f32 %v1621, %v1625
        %vm1627 = vweird.f32 %v1604
        %vm1628 = vweird.f32 %v1621
        %vm1629 = vmor %vm1627, %vm1628
        %v1630 = vsel %vm1629, %v1621, %v1626
        %v1631 = vrsqrt.pop %v1605
        %v1632 = vmul.f32 %v1631, %v1605
        %v1633 = vmul.f32 %v1632, %v1631
        %v1634 = vmul.f32 0.5, %v1633
        %v1635 = vsub.f32 1.5, %v1634
        %v1636 = vmul.f32 %v1631, %v1635
        %vm1637 = vweird.f32 %v1605
        %vm1638 = vweird.f32 %v1631
        %vm1639 = vmor %vm1637, %vm1638
        %v1640 = vsel %vm1639, %v1631, %v1636
        %v1641 = vrsqrt.pop %v1606
        %v1642 = vmul.f32 %v1641, %v1606
        %v1643 = vmul.f32 %v1642, %v1641
        %v1644 = vmul.f32 0.5, %v1643
        %v1645 = vsub.f32 1.5, %v1644
        %v1646 = vmul.f32 %v1641, %v1645
        %vm1647 = vweird.f32 %v1606
        %vm1648 = vweird.f32 %v1641
        %vm1649 = vmor %vm1647, %vm1648
        %v1650 = vsel %vm1649, %v1641, %v1646
        %v1651 = vrsqrt.pop %v1607
        %v1652 = vmul.f32 %v1651, %v1607
        %v1653 = vmul.f32 %v1652, %v1651
        %v1654 = vmul.f32 0.5, %v1653
        %v1655 = vsub.f32 1.5, %v1654
        %v1656 = vmul.f32 %v1651, %v1655
        %vm1657 = vweird.f32 %v1607
        %vm1658 = vweird.f32 %v1651
        %vm1659 = vmor %vm1657, %vm1658
        %v1660 = vsel %vm1659, %v1651, %v1656
        %v1661 = vrsqrt.pop %v1608
        %v1662 = vmul.f32 %v1661, %v1608
        %v1663 = vmul.f32 %v1662, %v1661
        %v1664 = vmul.f32 0.5, %v1663
        %v1665 = vsub.f32 1.5, %v1664
        %v1666 = vmul.f32 %v1661, %v1665
        %vm1667 = vweird.f32 %v1608
        %vm1668 = vweird.f32 %v1661
        %vm1669 = vmor %vm1667, %vm1668
        %v1670 = vsel %vm1669, %v1661, %v1666
        %v1671 = vrsqrt.pop %v1609
        %v1672 = vmul.f32 %v1671, %v1609
        %v1673 = vmul.f32 %v1672, %v1671
        %v1674 = vmul.f32 0.5, %v1673
        %v1675 = vsub.f32 1.5, %v1674
        %v1676 = vmul.f32 %v1671, %v1675
        %vm1677 = vweird.f32 %v1609
        %vm1678 = vweird.f32 %v1671
        %vm1679 = vmor %vm1677, %vm1678
        %v1680 = vsel %vm1679, %v1671, %v1676
        %v1681 = vrsqrt.pop %v1610
        %v1682 = vmul.f32 %v1681, %v1610
        %v1683 = vmul.f32 %v1682, %v1681
        %v1684 = vmul.f32 0.5, %v1683
        %v1685 = vsub.f32 1.5, %v1684
        %v1686 = vmul.f32 %v1681, %v1685
        %vm1687 = vweird.f32 %v1610
        %vm1688 = vweird.f32 %v1681
        %vm1689 = vmor %vm1687, %vm1688
        %v1690 = vsel %vm1689, %v1681, %v1686
        %v1691 = vmul.f32 %v1563, %v1620
        %v1692 = vmul.f32 %v1564, %v1630
        %v1693 = vmul.f32 %v1565, %v1640
        %v1694 = vmul.f32 %v1566, %v1650
        %v1695 = vmul.f32 %v1567, %v1660
        %v1696 = vmul.f32 %v1568, %v1670
        %v1697 = vmul.f32 %v1569, %v1680
        %v1698 = vmul.f32 %v1570, %v1690
        %v1700 = vperm.slane %v1529, 0
        %v1702 = vmul.f32 %v1691, %v1700
        %v1703 = vmul.f32 %v1692, %v1700
        %v1704 = vmul.f32 %v1693, %v1700
        %v1705 = vmul.f32 %v1694, %v1700
        %v1706 = vmul.f32 %v1695, %v1700
        %v1707 = vmul.f32 %v1696, %v1700
        %v1708 = vmul.f32 %v1697, %v1700
        %v1709 = vmul.f32 %v1698, %v1700
        %v1711 = vperm.slane %v1530, 0
        %v1713 = vadd.f32 %v1702, %v1711
        %v1714 = vadd.f32 %v1703, %v1711
        %v1715 = vadd.f32 %v1704, %v1711
        %v1716 = vadd.f32 %v1705, %v1711
        %v1717 = vadd.f32 %v1706, %v1711
        %v1718 = vadd.f32 %v1707, %v1711
        %v1719 = vadd.f32 %v1708, %v1711
        %v1720 = vadd.f32 %v1709, %v1711
        %v1721 = vadd.f32 %v507, %v1713
        %v1722 = vadd.f32 %v508, %v1714
        %v1723 = vadd.f32 %v509, %v1715
        %v1724 = vadd.f32 %v510, %v1716
        %v1725 = vadd.f32 %v511, %v1717
        %v1726 = vadd.f32 %v512, %v1718
        %v1727 = vadd.f32 %v513, %v1719
        %v1728 = vadd.f32 %v514, %v1720
        %1729 = vst [vmem:[%s464] sm:$0xff] %v1721
        %1730 = vst [vmem:[%s464 + $0x8] sm:$0xff] %v1722
        %1731 = vst [vmem:[%s464 + $0x10] sm:$0xff] %v1723
        %1732 = vst [vmem:[%s464 + $0x18] sm:$0xff] %v1724
        %1733 = vst [vmem:[%s464 + $0x20] sm:$0xff] %v1725
        %1734 = vst [vmem:[%s464 + $0x28] sm:$0xff] %v1726
        %1735 = vst [vmem:[%s464 + $0x30] sm:$0xff] %v1727
        %1736 = vst [vmem:[%s464 + $0x38] sm:$0xff] %v1728
        %s1737 = sand.u32 %s282, 1
        %s1738 = scalar_lea.sflag [#allocation6], %s1737
        %s1739 = sand.u32 %s282, 1
        %s1740 = smul.addr %s1739, 64
        %s1741 = scalar_lea.vmem [#allocation10], %s1740
        // Predicated region
        $region77: #{tpu_custom_call.1} parent=63 // pred_check
          %p1742 = pneg %p292
        $region78: #{tpu_custom_call.1} parent=63 // pred_check_branch
          %1744 = sbr.rel (%p1742) target = $region80
        $region79: #{tpu_custom_call.1} parent=63 // pred_region
          %1746 = vsyncadd %s1738, 0
          %s1747 = smul.addr %s33, 8
          %s1748 = scalar_lea.hbm %s11, %s1747
          %s1749 = sshll.u32 %s1741, 4
          %s1750 = int_to_ptr.vmem [resolvable:$true] %s1749
          %s1751 = sshll.u32 %s1748, 4
          %s1752 = int_to_ptr.hbm [resolvable:$true] %s1751
          %1757 = dma.vmem_to_hbm [thread:$0]  %s1750, 1024, %s1752, %s1738, 128, 256, 8
        $region80: #{tpu_custom_call.1} parent=63 // pred_fallthru
          _
      $region64: #{tpu_custom_call.1} parent=5 // pred_fallthru
        _
      %p1758 = scmp.le.s32.totalorder 2, %s28
      // Predicated region
      $region81: #{tpu_custom_call.1} parent=5 // pred_check
        %p1759 = pneg %p1758
      $region82: #{tpu_custom_call.1} parent=5 // pred_check_branch
        %1761 = sbr.rel (%p1759) target = $region84
      $region83: #{tpu_custom_call.1} parent=5 // pred_region
        %s1762 = ssub.s32 %s28, 2
        // Predicated region
        $region85: #{tpu_custom_call.1} parent=83 // pred_check
          %p1763 = pneg %p298
        $region86: #{tpu_custom_call.1} parent=83 // pred_check_branch
          %1765 = sbr.rel (%p1763) target = $region88
        $region87: #{tpu_custom_call.1} parent=83 // pred_region
          %s1766 = sand.u32 %s283, 1
          %s1767 = scalar_lea.sflag [#allocation6], %s1766
          %s1768 = sand.u32 %s283, 1
          %s1769 = smul.addr %s1768, 64
          %s1770 = scalar_lea.vmem [#allocation10], %s1769
          %1772 = dma.done %s1767, 1024
        $region88: #{tpu_custom_call.1} parent=83 // pred_fallthru
          _
      $region84: #{tpu_custom_call.1} parent=5 // pred_fallthru
        _
    $region6: #{tpu_custom_call.1} parent=1 // loop_footer
      %s32 = sadd.s32 1, %s28
    $region7: #{tpu_custom_call.1} parent=1 // loop_footer_branch
      %27 = sbr.rel target = $region3
    $region8: #{tpu_custom_call.1} parent=1 // loop_exit
      _
    %1773 = vsyncpa [#allocation5], 1
    %s1774 = scalar_lea.sflag [#allocation5], 1
    %1775 = vsyncpa %s1774, 1
    %1776 = vsyncpa [#allocation8], 1
    %s1777 = scalar_lea.sflag [#allocation8], 1
    %1778 = vsyncpa %s1777, 1
    %1779 = vsyncpa [#allocation6], 1
    %s1780 = scalar_lea.sflag [#allocation6], 1
    %1781 = vsyncpa %s1780, 1

</llo_original>
